<compile_context>
chip_gen: v7x
topology: tpu7x:2x2x1
jax: 0.10.0
libtpu: 0.0.40
codegen_flags: <defaults>
</compile_context>

<pallas_src>
import math
import functools

import jax
import jax.numpy as jnp
import numpy as np
from jax.experimental import pallas as pl
from jax.experimental.pallas import tpu as pltpu  # noqa: F401  (TPU backend import)

# ------------------------- config (small, deterministic) -------------------------
S = 8          # sequence length
B = 2          # batch
D = 32         # d_model
NHEAD = 4      # number of heads
HD = D // NHEAD
FF = 64        # dim_feedforward
EPS = 1e-5


# ------------------------------- Pallas kernel ------------------------------------
def encoder_layer_kernel(
    qk_ref, src_ref,                 # [B*S, D] activations (q=k input, and src for V/residual)
    wqk_ref, bqk_ref,                # [D, 2D], [1, 2D]   (Wq pre-scaled by 1/sqrt(HD), fused with Wk)
    wv_ref, bv_ref,                  # [D, D],  [1, D]
    wo_ref, bo_ref,                  # [D, D] (stored [in, out]), [1, D]
    g1_ref, be1_ref,                 # LayerNorm1 gamma/beta [1, D]
    w1_ref, b1_ref,                  # [D, FF], [1, FF]
    w2_ref, b2_ref,                  # [FF, D], [1, D]
    g2_ref, be2_ref,                 # LayerNorm2 gamma/beta [1, D]
    o_ref,                           # [B*S, D]
):
    x_qk = qk_ref[...]               # [B*S, D]
    src = src_ref[...]               # [B*S, D]

    # ---- fused Q/K projection and V projection (weights already [in, out]) ----
    qk_proj = jnp.dot(x_qk, wqk_ref[...], preferred_element_type=jnp.float32) + bqk_ref[...]  # [B*S, 2D]
    v = jnp.dot(src, wv_ref[...], preferred_element_type=jnp.float32) + bv_ref[...]           # [B*S, D]

    wo = wo_ref[...]                 # [D, D], rows indexed by head channels

    # contract last dims of q and k (NT matmul) -> no explicit transpose
    dn = (((1,), (1,)), ((), ()))

    # ---- multi-head attention: static loops over (batch, head); Wo distributed per head ----
    attn_rows = []
    for b in range(B):
        r0 = b * S
        acc_b = None                                              # [S, D] accumulator
        for h in range(NHEAD):
            c0 = h * HD
            qbh = qk_proj[r0:r0 + S, c0:c0 + HD]                  # [S, HD], already scaled
            kbh = qk_proj[r0:r0 + S, D + c0:D + c0 + HD]          # [S, HD]
            vbh = v[r0:r0 + S, c0:c0 + HD]                        # [S, HD]

            s = jax.lax.dot_general(qbh, kbh, dn,
                                    preferred_element_type=jnp.float32)   # [S, S]
            s = s - jnp.max(s, axis=-1, keepdims=True)
            p = jnp.exp(s)
            inv = pl.reciprocal(jnp.sum(p, axis=-1, keepdims=True), approx=True)
            p = p * inv                                           # softmax

            ctx = jnp.dot(p, vbh, preferred_element_type=jnp.float32)     # [S, HD]
            term = jnp.dot(ctx, wo[c0:c0 + HD, :],
                           preferred_element_type=jnp.float32)            # [S, D]
            acc_b = term if acc_b is None else acc_b + term
        attn_rows.append(acc_b)
    attn_out = jnp.concatenate(attn_rows, axis=0) + bo_ref[...]   # [B*S, D] (sublane concat, 8-aligned)

    # ---- residual + LayerNorm 1 ----
    x = src + attn_out
    mu = jnp.mean(x, axis=-1, keepdims=True)
    var = jnp.mean((x - mu) ** 2, axis=-1, keepdims=True)
    x = (x - mu) * jax.lax.rsqrt(var + EPS) * g1_ref[...] + be1_ref[...]

    # ---- feed-forward (relu) + residual + LayerNorm 2 ----
    h1 = jnp.dot(x, w1_ref[...], preferred_element_type=jnp.float32) + b1_ref[...]
    h1 = jnp.maximum(h1, 0.0)
    y = x + jnp.dot(h1, w2_ref[...], preferred_element_type=jnp.float32) + b2_ref[...]
    mu2 = jnp.mean(y, axis=-1, keepdims=True)
    var2 = jnp.mean((y - mu2) ** 2, axis=-1, keepdims=True)
    y = (y - mu2) * jax.lax.rsqrt(var2 + EPS) * g2_ref[...] + be2_ref[...]

    o_ref[...] = y.astype(o_ref.dtype)


# ------------------------------- wrapper -------------------------------------------
@functools.partial(jax.jit, static_argnames=())
def transformer_encoder_layer(src_sbd, pos_sbd, params):
    """src_sbd, pos_sbd: [S, B, D] (PyTorch convention). Returns [S, B, D]."""
    # convert to kernel layout [B*S, D] (row-major identical to batch-major [B, S, D])
    src = jnp.transpose(src_sbd, (1, 0, 2)).reshape(B * S, D)
    pos = jnp.transpose(pos_sbd, (1, 0, 2)).reshape(B * S, D)
    qk = src + pos

    def row(vec):  # 1-D params as [1, N] so VMEM blocks are 2-D
        return vec.reshape(1, -1)

    # one-time wrapper-side weight prep: transpose to [in, out], fuse Wq/Wk, fold attn scale
    scale = 1.0 / math.sqrt(HD)
    wq_t = params["wq"].T * scale                        # [D, D]
    wk_t = params["wk"].T                                # [D, D]
    wqk = jnp.concatenate([wq_t, wk_t], axis=1)          # [D, 2D]
    bqk = jnp.concatenate([params["bq"] * scale, params["bk"]], axis=0).reshape(1, 2 * D)

    out2d = pl.pallas_call(
        encoder_layer_kernel,
        out_shape=jax.ShapeDtypeStruct((B * S, D), jnp.float32),
        # no grid: single invocation, whole problem resident in VMEM (<100 KiB footprint)
    )(
        qk, src,
        wqk, bqk,
        params["wv"].T, row(params["bv"]),
        params["wo"].T, row(params["bo"]),
        row(params["g1"]), row(params["be1"]),
        params["w1"].T, row(params["b1"]),
        params["w2"].T, row(params["b2"]),
        row(params["g2"]), row(params["be2"]),
    )
    return jnp.transpose(out2d.reshape(B, S, D), (1, 0, 2))   # back to [S, B, D]


# ------------------------------- pure-JAX reference --------------------------------
def reference(src_sbd, pos_sbd, p):
    src = jnp.transpose(src_sbd, (1, 0, 2))   # [B, S, D]
    pos = jnp.transpose(pos_sbd, (1, 0, 2))
    qk = src + pos
    q = qk @ p["wq"].T + p["bq"]
    k = qk @ p["wk"].T + p["bk"]
    v = src @ p["wv"].T + p["bv"]
    qh = q.reshape(B, S, NHEAD, HD).transpose(0, 2, 1, 3)
    kh = k.reshape(B, S, NHEAD, HD).transpose(0, 2, 1, 3)
    vh = v.reshape(B, S, NHEAD, HD).transpose(0, 2, 1, 3)
    scores = jnp.einsum("bhqd,bhkd->bhqk", qh, kh) / math.sqrt(HD)
    attn = jax.nn.softmax(scores, axis=-1)
    ctx = jnp.einsum("bhqk,bhkd->bhqd", attn, vh).transpose(0, 2, 1, 3).reshape(B, S, D)
    attn_out = ctx @ p["wo"].T + p["bo"]

    def ln(x, g, b):
        mu = x.mean(-1, keepdims=True)
        var = ((x - mu) ** 2).mean(-1, keepdims=True)
        return (x - mu) * jax.lax.rsqrt(var + EPS) * g + b

    x = ln(src + attn_out, p["g1"], p["be1"])
    h = jnp.maximum(x @ p["w1"].T + p["b1"], 0.0)
    y = ln(x + h @ p["w2"].T + p["b2"], p["g2"], p["be2"])
    return jnp.transpose(y, (1, 0, 2))


# ------------------------------- main ------------------------------------------------
if __name__ == "__main__":
    key = jax.random.PRNGKey(0)
    ks = jax.random.split(key, 16)

    params = {
        "wq": jax.random.normal(ks[0], (D, D), jnp.float32) * 0.05,
        "wk": jax.random.normal(ks[1], (D, D), jnp.float32) * 0.05,
        "wv": jax.random.normal(ks[2], (D, D), jnp.float32) * 0.05,
        "bq": jax.random.normal(ks[3], (D,), jnp.float32) * 0.05,
        "bk": jax.random.normal(ks[4], (D,), jnp.float32) * 0.05,
        "bv": jax.random.normal(ks[5], (D,), jnp.float32) * 0.05,
        "wo": jax.random.normal(ks[6], (D, D), jnp.float32) * 0.05,
        "bo": jax.random.normal(ks[7], (D,), jnp.float32) * 0.05,
        "g1": jnp.ones((D,), jnp.float32),
        "be1": jnp.zeros((D,), jnp.float32),
        "w1": jax.random.normal(ks[8], (FF, D), jnp.float32) * 0.05,
        "b1": jax.random.normal(ks[9], (FF,), jnp.float32) * 0.05,
        "w2": jax.random.normal(ks[10], (D, FF), jnp.float32) * 0.05,
        "b2": jax.random.normal(ks[11], (D,), jnp.float32) * 0.05,
        "g2": jnp.ones((D,), jnp.float32),
        "be2": jnp.zeros((D,), jnp.float32),
    }

    src = jax.random.normal(ks[12], (S, B, D), jnp.float32)   # [seq, batch, d_model]
    pos = jax.random.normal(ks[13], (S, B, D), jnp.float32)

    out = transformer_encoder_layer(src, pos, params)
    out = jax.block_until_ready(out)

    ref = reference(src, pos, params)
    # tolerance 1e-3: approx (EUP) reciprocal in the softmax denominator, fp32 everywhere else
    np.testing.assert_allclose(np.asarray(out), np.asarray(ref), rtol=1e-3, atol=1e-3)

    print("KERNEL_OK")
</pallas_src>

<mosaic_0001>
module attributes {stable_mosaic.version = 11 : i64} {
  func.func @encoder_layer_kernel(%arg0: memref<16x32xf32, #tpu.memory_space<vmem>>, %arg1: memref<16x32xf32, #tpu.memory_space<vmem>>, %arg2: memref<32x64xf32, #tpu.memory_space<vmem>>, %arg3: memref<1x64xf32, #tpu.memory_space<vmem>>, %arg4: memref<32x32xf32, #tpu.memory_space<vmem>>, %arg5: memref<1x32xf32, #tpu.memory_space<vmem>>, %arg6: memref<32x32xf32, #tpu.memory_space<vmem>>, %arg7: memref<1x32xf32, #tpu.memory_space<vmem>>, %arg8: memref<1x32xf32, #tpu.memory_space<vmem>>, %arg9: memref<1x32xf32, #tpu.memory_space<vmem>>, %arg10: memref<32x64xf32, #tpu.memory_space<vmem>>, %arg11: memref<1x64xf32, #tpu.memory_space<vmem>>, %arg12: memref<64x32xf32, #tpu.memory_space<vmem>>, %arg13: memref<1x32xf32, #tpu.memory_space<vmem>>, %arg14: memref<1x32xf32, #tpu.memory_space<vmem>>, %arg15: memref<1x32xf32, #tpu.memory_space<vmem>>, %arg16: memref<16x32xf32, #tpu.memory_space<vmem>>) attributes {dimension_semantics = [], scalar_prefetch = 0 : i64, scratch_operands = 0 : i64, tpu.core_type = #tpu.core_type<tc>} {
    %c0 = arith.constant 0 : index
    %c0_0 = arith.constant 0 : index
    %0 = vector.load %arg0[%c0, %c0_0] : memref<16x32xf32, #tpu.memory_space<vmem>>, vector<16x32xf32>
    %c0_1 = arith.constant 0 : index
    %c0_2 = arith.constant 0 : index
    %1 = vector.load %arg1[%c0_1, %c0_2] : memref<16x32xf32, #tpu.memory_space<vmem>>, vector<16x32xf32>
    %c0_3 = arith.constant 0 : index
    %c0_4 = arith.constant 0 : index
    %2 = vector.load %arg2[%c0_3, %c0_4] : memref<32x64xf32, #tpu.memory_space<vmem>>, vector<32x64xf32>
    %cst = arith.constant dense<0.000000e+00> : vector<16x64xf32>
    %3 = tpu.matmul %0, %2, %cst {dimension_numbers = #tpu.dot_dimension_numbers<[1], [0], [0], [1], [0, 0, 1, 1], [], []>} : vector<16x32xf32>, vector<32x64xf32>, vector<16x64xf32> -> vector<16x64xf32>
    %c0_5 = arith.constant 0 : index
    %c0_6 = arith.constant 0 : index
    %4 = vector.load %arg3[%c0_5, %c0_6] : memref<1x64xf32, #tpu.memory_space<vmem>>, vector<1x64xf32>
    %5 = vector.broadcast %4 : vector<1x64xf32> to vector<16x64xf32>
    %6 = arith.addf %3, %5 : vector<16x64xf32>
    %c0_7 = arith.constant 0 : index
    %c0_8 = arith.constant 0 : index
    %7 = vector.load %arg4[%c0_7, %c0_8] : memref<32x32xf32, #tpu.memory_space<vmem>>, vector<32x32xf32>
    %cst_9 = arith.constant dense<0.000000e+00> : vector<16x32xf32>
    %8 = tpu.matmul %1, %7, %cst_9 {dimension_numbers = #tpu.dot_dimension_numbers<[1], [0], [0], [1], [0, 0, 1, 1], [], []>} : vector<16x32xf32>, vector<32x32xf32>, vector<16x32xf32> -> vector<16x32xf32>
    %c0_10 = arith.constant 0 : index
    %c0_11 = arith.constant 0 : index
    %9 = vector.load %arg5[%c0_10, %c0_11] : memref<1x32xf32, #tpu.memory_space<vmem>>, vector<1x32xf32>
    %10 = vector.broadcast %9 : vector<1x32xf32> to vector<16x32xf32>
    %11 = arith.addf %8, %10 : vector<16x32xf32>
    %c0_12 = arith.constant 0 : index
    %c0_13 = arith.constant 0 : index
    %12 = vector.load %arg6[%c0_12, %c0_13] : memref<32x32xf32, #tpu.memory_space<vmem>>, vector<32x32xf32>
    %13 = vector.extract_strided_slice %6 {offsets = [0, 0], sizes = [8, 8], strides = [1, 1]} : vector<16x64xf32> to vector<8x8xf32>
    %14 = vector.extract_strided_slice %6 {offsets = [0, 32], sizes = [8, 8], strides = [1, 1]} : vector<16x64xf32> to vector<8x8xf32>
    %15 = vector.extract_strided_slice %11 {offsets = [0, 0], sizes = [8, 8], strides = [1, 1]} : vector<16x32xf32> to vector<8x8xf32>
    %cst_14 = arith.constant dense<0.000000e+00> : vector<8x8xf32>
    %16 = tpu.matmul %13, %14, %cst_14 {dimension_numbers = #tpu.dot_dimension_numbers<[1], [1], [0], [0], [0, 0, 1, 0], [], []>} : vector<8x8xf32>, vector<8x8xf32>, vector<8x8xf32> -> vector<8x8xf32>
    %cst_15 = arith.constant dense<0xFF800000> : vector<8xf32>
    %17 = vector.multi_reduction <maximumf>, %16, %cst_15 [1] : vector<8x8xf32> to vector<8xf32>
    %18 = vector.shape_cast %17 : vector<8xf32> to vector<8x1xf32>
    %19 = vector.broadcast %18 : vector<8x1xf32> to vector<8x8xf32>
    %20 = arith.subf %16, %19 : vector<8x8xf32>
    %21 = math.exp %20 : vector<8x8xf32>
    %cst_16 = arith.constant dense<0.000000e+00> : vector<8xf32>
    %22 = vector.multi_reduction <add>, %21, %cst_16 [1] : vector<8x8xf32> to vector<8xf32>
    %23 = vector.shape_cast %22 : vector<8xf32> to vector<8x1xf32>
    %24 = tpu.reciprocal %23 {approx = true} : vector<8x1xf32> -> vector<8x1xf32>
    %25 = vector.broadcast %24 : vector<8x1xf32> to vector<8x8xf32>
    %26 = arith.mulf %21, %25 : vector<8x8xf32>
    %cst_17 = arith.constant dense<0.000000e+00> : vector<8x8xf32>
    %27 = tpu.matmul %26, %15, %cst_17 {dimension_numbers = #tpu.dot_dimension_numbers<[1], [0], [0], [1], [0, 0, 1, 1], [], []>} : vector<8x8xf32>, vector<8x8xf32>, vector<8x8xf32> -> vector<8x8xf32>
    %28 = vector.extract_strided_slice %12 {offsets = [0, 0], sizes = [8, 32], strides = [1, 1]} : vector<32x32xf32> to vector<8x32xf32>
    %cst_18 = arith.constant dense<0.000000e+00> : vector<8x32xf32>
    %29 = tpu.matmul %27, %28, %cst_18 {dimension_numbers = #tpu.dot_dimension_numbers<[1], [0], [0], [1], [0, 0, 1, 1], [], []>} : vector<8x8xf32>, vector<8x32xf32>, vector<8x32xf32> -> vector<8x32xf32>
    %30 = vector.extract_strided_slice %6 {offsets = [0, 8], sizes = [8, 8], strides = [1, 1]} : vector<16x64xf32> to vector<8x8xf32>
    %31 = vector.extract_strided_slice %6 {offsets = [0, 40], sizes = [8, 8], strides = [1, 1]} : vector<16x64xf32> to vector<8x8xf32>
    %32 = vector.extract_strided_slice %11 {offsets = [0, 8], sizes = [8, 8], strides = [1, 1]} : vector<16x32xf32> to vector<8x8xf32>
    %cst_19 = arith.constant dense<0.000000e+00> : vector<8x8xf32>
    %33 = tpu.matmul %30, %31, %cst_19 {dimension_numbers = #tpu.dot_dimension_numbers<[1], [1], [0], [0], [0, 0, 1, 0], [], []>} : vector<8x8xf32>, vector<8x8xf32>, vector<8x8xf32> -> vector<8x8xf32>
    %cst_20 = arith.constant dense<0xFF800000> : vector<8xf32>
    %34 = vector.multi_reduction <maximumf>, %33, %cst_20 [1] : vector<8x8xf32> to vector<8xf32>
    %35 = vector.shape_cast %34 : vector<8xf32> to vector<8x1xf32>
    %36 = vector.broadcast %35 : vector<8x1xf32> to vector<8x8xf32>
    %37 = arith.subf %33, %36 : vector<8x8xf32>
    %38 = math.exp %37 : vector<8x8xf32>
    %cst_21 = arith.constant dense<0.000000e+00> : vector<8xf32>
    %39 = vector.multi_reduction <add>, %38, %cst_21 [1] : vector<8x8xf32> to vector<8xf32>
    %40 = vector.shape_cast %39 : vector<8xf32> to vector<8x1xf32>
    %41 = tpu.reciprocal %40 {approx = true} : vector<8x1xf32> -> vector<8x1xf32>
    %42 = vector.broadcast %41 : vector<8x1xf32> to vector<8x8xf32>
    %43 = arith.mulf %38, %42 : vector<8x8xf32>
    %cst_22 = arith.constant dense<0.000000e+00> : vector<8x8xf32>
    %44 = tpu.matmul %43, %32, %cst_22 {dimension_numbers = #tpu.dot_dimension_numbers<[1], [0], [0], [1], [0, 0, 1, 1], [], []>} : vector<8x8xf32>, vector<8x8xf32>, vector<8x8xf32> -> vector<8x8xf32>
    %45 = vector.extract_strided_slice %12 {offsets = [8, 0], sizes = [8, 32], strides = [1, 1]} : vector<32x32xf32> to vector<8x32xf32>
    %cst_23 = arith.constant dense<0.000000e+00> : vector<8x32xf32>
    %46 = tpu.matmul %44, %45, %cst_23 {dimension_numbers = #tpu.dot_dimension_numbers<[1], [0], [0], [1], [0, 0, 1, 1], [], []>} : vector<8x8xf32>, vector<8x32xf32>, vector<8x32xf32> -> vector<8x32xf32>
    %47 = arith.addf %29, %46 : vector<8x32xf32>
    %48 = vector.extract_strided_slice %6 {offsets = [0, 16], sizes = [8, 8], strides = [1, 1]} : vector<16x64xf32> to vector<8x8xf32>
    %49 = vector.extract_strided_slice %6 {offsets = [0, 48], sizes = [8, 8], strides = [1, 1]} : vector<16x64xf32> to vector<8x8xf32>
    %50 = vector.extract_strided_slice %11 {offsets = [0, 16], sizes = [8, 8], strides = [1, 1]} : vector<16x32xf32> to vector<8x8xf32>
    %cst_24 = arith.constant dense<0.000000e+00> : vector<8x8xf32>
    %51 = tpu.matmul %48, %49, %cst_24 {dimension_numbers = #tpu.dot_dimension_numbers<[1], [1], [0], [0], [0, 0, 1, 0], [], []>} : vector<8x8xf32>, vector<8x8xf32>, vector<8x8xf32> -> vector<8x8xf32>
    %cst_25 = arith.constant dense<0xFF800000> : vector<8xf32>
    %52 = vector.multi_reduction <maximumf>, %51, %cst_25 [1] : vector<8x8xf32> to vector<8xf32>
    %53 = vector.shape_cast %52 : vector<8xf32> to vector<8x1xf32>
    %54 = vector.broadcast %53 : vector<8x1xf32> to vector<8x8xf32>
    %55 = arith.subf %51, %54 : vector<8x8xf32>
    %56 = math.exp %55 : vector<8x8xf32>
    %cst_26 = arith.constant dense<0.000000e+00> : vector<8xf32>
    %57 = vector.multi_reduction <add>, %56, %cst_26 [1] : vector<8x8xf32> to vector<8xf32>
    %58 = vector.shape_cast %57 : vector<8xf32> to vector<8x1xf32>
    %59 = tpu.reciprocal %58 {approx = true} : vector<8x1xf32> -> vector<8x1xf32>
    %60 = vector.broadcast %59 : vector<8x1xf32> to vector<8x8xf32>
    %61 = arith.mulf %56, %60 : vector<8x8xf32>
    %cst_27 = arith.constant dense<0.000000e+00> : vector<8x8xf32>
    %62 = tpu.matmul %61, %50, %cst_27 {dimension_numbers = #tpu.dot_dimension_numbers<[1], [0], [0], [1], [0, 0, 1, 1], [], []>} : vector<8x8xf32>, vector<8x8xf32>, vector<8x8xf32> -> vector<8x8xf32>
    %63 = vector.extract_strided_slice %12 {offsets = [16, 0], sizes = [8, 32], strides = [1, 1]} : vector<32x32xf32> to vector<8x32xf32>
    %cst_28 = arith.constant dense<0.000000e+00> : vector<8x32xf32>
    %64 = tpu.matmul %62, %63, %cst_28 {dimension_numbers = #tpu.dot_dimension_numbers<[1], [0], [0], [1], [0, 0, 1, 1], [], []>} : vector<8x8xf32>, vector<8x32xf32>, vector<8x32xf32> -> vector<8x32xf32>
    %65 = arith.addf %47, %64 : vector<8x32xf32>
    %66 = vector.extract_strided_slice %6 {offsets = [0, 24], sizes = [8, 8], strides = [1, 1]} : vector<16x64xf32> to vector<8x8xf32>
    %67 = vector.extract_strided_slice %6 {offsets = [0, 56], sizes = [8, 8], strides = [1, 1]} : vector<16x64xf32> to vector<8x8xf32>
    %68 = vector.extract_strided_slice %11 {offsets = [0, 24], sizes = [8, 8], strides = [1, 1]} : vector<16x32xf32> to vector<8x8xf32>
    %cst_29 = arith.constant dense<0.000000e+00> : vector<8x8xf32>
    %69 = tpu.matmul %66, %67, %cst_29 {dimension_numbers = #tpu.dot_dimension_numbers<[1], [1], [0], [0], [0, 0, 1, 0], [], []>} : vector<8x8xf32>, vector<8x8xf32>, vector<8x8xf32> -> vector<8x8xf32>
    %cst_30 = arith.constant dense<0xFF800000> : vector<8xf32>
    %70 = vector.multi_reduction <maximumf>, %69, %cst_30 [1] : vector<8x8xf32> to vector<8xf32>
    %71 = vector.shape_cast %70 : vector<8xf32> to vector<8x1xf32>
    %72 = vector.broadcast %71 : vector<8x1xf32> to vector<8x8xf32>
    %73 = arith.subf %69, %72 : vector<8x8xf32>
    %74 = math.exp %73 : vector<8x8xf32>
    %cst_31 = arith.constant dense<0.000000e+00> : vector<8xf32>
    %75 = vector.multi_reduction <add>, %74, %cst_31 [1] : vector<8x8xf32> to vector<8xf32>
    %76 = vector.shape_cast %75 : vector<8xf32> to vector<8x1xf32>
    %77 = tpu.reciprocal %76 {approx = true} : vector<8x1xf32> -> vector<8x1xf32>
    %78 = vector.broadcast %77 : vector<8x1xf32> to vector<8x8xf32>
    %79 = arith.mulf %74, %78 : vector<8x8xf32>
    %cst_32 = arith.constant dense<0.000000e+00> : vector<8x8xf32>
    %80 = tpu.matmul %79, %68, %cst_32 {dimension_numbers = #tpu.dot_dimension_numbers<[1], [0], [0], [1], [0, 0, 1, 1], [], []>} : vector<8x8xf32>, vector<8x8xf32>, vector<8x8xf32> -> vector<8x8xf32>
    %81 = vector.extract_strided_slice %12 {offsets = [24, 0], sizes = [8, 32], strides = [1, 1]} : vector<32x32xf32> to vector<8x32xf32>
    %cst_33 = arith.constant dense<0.000000e+00> : vector<8x32xf32>
    %82 = tpu.matmul %80, %81, %cst_33 {dimension_numbers = #tpu.dot_dimension_numbers<[1], [0], [0], [1], [0, 0, 1, 1], [], []>} : vector<8x8xf32>, vector<8x32xf32>, vector<8x32xf32> -> vector<8x32xf32>
    %83 = arith.addf %65, %82 : vector<8x32xf32>
    %84 = vector.extract_strided_slice %6 {offsets = [8, 0], sizes = [8, 8], strides = [1, 1]} : vector<16x64xf32> to vector<8x8xf32>
    %85 = vector.extract_strided_slice %6 {offsets = [8, 32], sizes = [8, 8], strides = [1, 1]} : vector<16x64xf32> to vector<8x8xf32>
    %86 = vector.extract_strided_slice %11 {offsets = [8, 0], sizes = [8, 8], strides = [1, 1]} : vector<16x32xf32> to vector<8x8xf32>
    %cst_34 = arith.constant dense<0.000000e+00> : vector<8x8xf32>
    %87 = tpu.matmul %84, %85, %cst_34 {dimension_numbers = #tpu.dot_dimension_numbers<[1], [1], [0], [0], [0, 0, 1, 0], [], []>} : vector<8x8xf32>, vector<8x8xf32>, vector<8x8xf32> -> vector<8x8xf32>
    %cst_35 = arith.constant dense<0xFF800000> : vector<8xf32>
    %88 = vector.multi_reduction <maximumf>, %87, %cst_35 [1] : vector<8x8xf32> to vector<8xf32>
    %89 = vector.shape_cast %88 : vector<8xf32> to vector<8x1xf32>
    %90 = vector.broadcast %89 : vector<8x1xf32> to vector<8x8xf32>
    %91 = arith.subf %87, %90 : vector<8x8xf32>
    %92 = math.exp %91 : vector<8x8xf32>
    %cst_36 = arith.constant dense<0.000000e+00> : vector<8xf32>
    %93 = vector.multi_reduction <add>, %92, %cst_36 [1] : vector<8x8xf32> to vector<8xf32>
    %94 = vector.shape_cast %93 : vector<8xf32> to vector<8x1xf32>
    %95 = tpu.reciprocal %94 {approx = true} : vector<8x1xf32> -> vector<8x1xf32>
    %96 = vector.broadcast %95 : vector<8x1xf32> to vector<8x8xf32>
    %97 = arith.mulf %92, %96 : vector<8x8xf32>
    %cst_37 = arith.constant dense<0.000000e+00> : vector<8x8xf32>
    %98 = tpu.matmul %97, %86, %cst_37 {dimension_numbers = #tpu.dot_dimension_numbers<[1], [0], [0], [1], [0, 0, 1, 1], [], []>} : vector<8x8xf32>, vector<8x8xf32>, vector<8x8xf32> -> vector<8x8xf32>
    %99 = vector.extract_strided_slice %12 {offsets = [0, 0], sizes = [8, 32], strides = [1, 1]} : vector<32x32xf32> to vector<8x32xf32>
    %cst_38 = arith.constant dense<0.000000e+00> : vector<8x32xf32>
    %100 = tpu.matmul %98, %99, %cst_38 {dimension_numbers = #tpu.dot_dimension_numbers<[1], [0], [0], [1], [0, 0, 1, 1], [], []>} : vector<8x8xf32>, vector<8x32xf32>, vector<8x32xf32> -> vector<8x32xf32>
    %101 = vector.extract_strided_slice %6 {offsets = [8, 8], sizes = [8, 8], strides = [1, 1]} : vector<16x64xf32> to vector<8x8xf32>
    %102 = vector.extract_strided_slice %6 {offsets = [8, 40], sizes = [8, 8], strides = [1, 1]} : vector<16x64xf32> to vector<8x8xf32>
    %103 = vector.extract_strided_slice %11 {offsets = [8, 8], sizes = [8, 8], strides = [1, 1]} : vector<16x32xf32> to vector<8x8xf32>
    %cst_39 = arith.constant dense<0.000000e+00> : vector<8x8xf32>
    %104 = tpu.matmul %101, %102, %cst_39 {dimension_numbers = #tpu.dot_dimension_numbers<[1], [1], [0], [0], [0, 0, 1, 0], [], []>} : vector<8x8xf32>, vector<8x8xf32>, vector<8x8xf32> -> vector<8x8xf32>
    %cst_40 = arith.constant dense<0xFF800000> : vector<8xf32>
    %105 = vector.multi_reduction <maximumf>, %104, %cst_40 [1] : vector<8x8xf32> to vector<8xf32>
    %106 = vector.shape_cast %105 : vector<8xf32> to vector<8x1xf32>
    %107 = vector.broadcast %106 : vector<8x1xf32> to vector<8x8xf32>
    %108 = arith.subf %104, %107 : vector<8x8xf32>
    %109 = math.exp %108 : vector<8x8xf32>
    %cst_41 = arith.constant dense<0.000000e+00> : vector<8xf32>
    %110 = vector.multi_reduction <add>, %109, %cst_41 [1] : vector<8x8xf32> to vector<8xf32>
    %111 = vector.shape_cast %110 : vector<8xf32> to vector<8x1xf32>
    %112 = tpu.reciprocal %111 {approx = true} : vector<8x1xf32> -> vector<8x1xf32>
    %113 = vector.broadcast %112 : vector<8x1xf32> to vector<8x8xf32>
    %114 = arith.mulf %109, %113 : vector<8x8xf32>
    %cst_42 = arith.constant dense<0.000000e+00> : vector<8x8xf32>
    %115 = tpu.matmul %114, %103, %cst_42 {dimension_numbers = #tpu.dot_dimension_numbers<[1], [0], [0], [1], [0, 0, 1, 1], [], []>} : vector<8x8xf32>, vector<8x8xf32>, vector<8x8xf32> -> vector<8x8xf32>
    %116 = vector.extract_strided_slice %12 {offsets = [8, 0], sizes = [8, 32], strides = [1, 1]} : vector<32x32xf32> to vector<8x32xf32>
    %cst_43 = arith.constant dense<0.000000e+00> : vector<8x32xf32>
    %117 = tpu.matmul %115, %116, %cst_43 {dimension_numbers = #tpu.dot_dimension_numbers<[1], [0], [0], [1], [0, 0, 1, 1], [], []>} : vector<8x8xf32>, vector<8x32xf32>, vector<8x32xf32> -> vector<8x32xf32>
    %118 = arith.addf %100, %117 : vector<8x32xf32>
    %119 = vector.extract_strided_slice %6 {offsets = [8, 16], sizes = [8, 8], strides = [1, 1]} : vector<16x64xf32> to vector<8x8xf32>
    %120 = vector.extract_strided_slice %6 {offsets = [8, 48], sizes = [8, 8], strides = [1, 1]} : vector<16x64xf32> to vector<8x8xf32>
    %121 = vector.extract_strided_slice %11 {offsets = [8, 16], sizes = [8, 8], strides = [1, 1]} : vector<16x32xf32> to vector<8x8xf32>
    %cst_44 = arith.constant dense<0.000000e+00> : vector<8x8xf32>
    %122 = tpu.matmul %119, %120, %cst_44 {dimension_numbers = #tpu.dot_dimension_numbers<[1], [1], [0], [0], [0, 0, 1, 0], [], []>} : vector<8x8xf32>, vector<8x8xf32>, vector<8x8xf32> -> vector<8x8xf32>
    %cst_45 = arith.constant dense<0xFF800000> : vector<8xf32>
    %123 = vector.multi_reduction <maximumf>, %122, %cst_45 [1] : vector<8x8xf32> to vector<8xf32>
    %124 = vector.shape_cast %123 : vector<8xf32> to vector<8x1xf32>
    %125 = vector.broadcast %124 : vector<8x1xf32> to vector<8x8xf32>
    %126 = arith.subf %122, %125 : vector<8x8xf32>
    %127 = math.exp %126 : vector<8x8xf32>
    %cst_46 = arith.constant dense<0.000000e+00> : vector<8xf32>
    %128 = vector.multi_reduction <add>, %127, %cst_46 [1] : vector<8x8xf32> to vector<8xf32>
    %129 = vector.shape_cast %128 : vector<8xf32> to vector<8x1xf32>
    %130 = tpu.reciprocal %129 {approx = true} : vector<8x1xf32> -> vector<8x1xf32>
    %131 = vector.broadcast %130 : vector<8x1xf32> to vector<8x8xf32>
    %132 = arith.mulf %127, %131 : vector<8x8xf32>
    %cst_47 = arith.constant dense<0.000000e+00> : vector<8x8xf32>
    %133 = tpu.matmul %132, %121, %cst_47 {dimension_numbers = #tpu.dot_dimension_numbers<[1], [0], [0], [1], [0, 0, 1, 1], [], []>} : vector<8x8xf32>, vector<8x8xf32>, vector<8x8xf32> -> vector<8x8xf32>
    %134 = vector.extract_strided_slice %12 {offsets = [16, 0], sizes = [8, 32], strides = [1, 1]} : vector<32x32xf32> to vector<8x32xf32>
    %cst_48 = arith.constant dense<0.000000e+00> : vector<8x32xf32>
    %135 = tpu.matmul %133, %134, %cst_48 {dimension_numbers = #tpu.dot_dimension_numbers<[1], [0], [0], [1], [0, 0, 1, 1], [], []>} : vector<8x8xf32>, vector<8x32xf32>, vector<8x32xf32> -> vector<8x32xf32>
    %136 = arith.addf %118, %135 : vector<8x32xf32>
    %137 = vector.extract_strided_slice %6 {offsets = [8, 24], sizes = [8, 8], strides = [1, 1]} : vector<16x64xf32> to vector<8x8xf32>
    %138 = vector.extract_strided_slice %6 {offsets = [8, 56], sizes = [8, 8], strides = [1, 1]} : vector<16x64xf32> to vector<8x8xf32>
    %139 = vector.extract_strided_slice %11 {offsets = [8, 24], sizes = [8, 8], strides = [1, 1]} : vector<16x32xf32> to vector<8x8xf32>
    %cst_49 = arith.constant dense<0.000000e+00> : vector<8x8xf32>
    %140 = tpu.matmul %137, %138, %cst_49 {dimension_numbers = #tpu.dot_dimension_numbers<[1], [1], [0], [0], [0, 0, 1, 0], [], []>} : vector<8x8xf32>, vector<8x8xf32>, vector<8x8xf32> -> vector<8x8xf32>
    %cst_50 = arith.constant dense<0xFF800000> : vector<8xf32>
    %141 = vector.multi_reduction <maximumf>, %140, %cst_50 [1] : vector<8x8xf32> to vector<8xf32>
    %142 = vector.shape_cast %141 : vector<8xf32> to vector<8x1xf32>
    %143 = vector.broadcast %142 : vector<8x1xf32> to vector<8x8xf32>
    %144 = arith.subf %140, %143 : vector<8x8xf32>
    %145 = math.exp %144 : vector<8x8xf32>
    %cst_51 = arith.constant dense<0.000000e+00> : vector<8xf32>
    %146 = vector.multi_reduction <add>, %145, %cst_51 [1] : vector<8x8xf32> to vector<8xf32>
    %147 = vector.shape_cast %146 : vector<8xf32> to vector<8x1xf32>
    %148 = tpu.reciprocal %147 {approx = true} : vector<8x1xf32> -> vector<8x1xf32>
    %149 = vector.broadcast %148 : vector<8x1xf32> to vector<8x8xf32>
    %150 = arith.mulf %145, %149 : vector<8x8xf32>
    %cst_52 = arith.constant dense<0.000000e+00> : vector<8x8xf32>
    %151 = tpu.matmul %150, %139, %cst_52 {dimension_numbers = #tpu.dot_dimension_numbers<[1], [0], [0], [1], [0, 0, 1, 1], [], []>} : vector<8x8xf32>, vector<8x8xf32>, vector<8x8xf32> -> vector<8x8xf32>
    %152 = vector.extract_strided_slice %12 {offsets = [24, 0], sizes = [8, 32], strides = [1, 1]} : vector<32x32xf32> to vector<8x32xf32>
    %cst_53 = arith.constant dense<0.000000e+00> : vector<8x32xf32>
    %153 = tpu.matmul %151, %152, %cst_53 {dimension_numbers = #tpu.dot_dimension_numbers<[1], [0], [0], [1], [0, 0, 1, 1], [], []>} : vector<8x8xf32>, vector<8x32xf32>, vector<8x32xf32> -> vector<8x32xf32>
    %154 = arith.addf %136, %153 : vector<8x32xf32>
    %155 = tpu.concatenate %83, %154 in 0 : vector<8x32xf32>, vector<8x32xf32> -> vector<16x32xf32>
    %c0_54 = arith.constant 0 : index
    %c0_55 = arith.constant 0 : index
    %156 = vector.load %arg7[%c0_54, %c0_55] : memref<1x32xf32, #tpu.memory_space<vmem>>, vector<1x32xf32>
    %157 = vector.broadcast %156 : vector<1x32xf32> to vector<16x32xf32>
    %158 = arith.addf %155, %157 : vector<16x32xf32>
    %159 = arith.addf %1, %158 : vector<16x32xf32>
    %cst_56 = arith.constant dense<0.000000e+00> : vector<16xf32>
    %160 = vector.multi_reduction <add>, %159, %cst_56 [1] : vector<16x32xf32> to vector<16xf32>
    %161 = vector.shape_cast %160 : vector<16xf32> to vector<16x1xf32>
    %cst_57 = arith.constant 3.200000e+01 : f32
    %162 = vector.broadcast %cst_57 : f32 to vector<16x1xf32>
    %163 = arith.divf %161, %162 : vector<16x1xf32>
    %164 = vector.broadcast %163 : vector<16x1xf32> to vector<16x32xf32>
    %165 = arith.subf %159, %164 : vector<16x32xf32>
    %166 = arith.mulf %165, %165 : vector<16x32xf32>
    %cst_58 = arith.constant dense<0.000000e+00> : vector<16xf32>
    %167 = vector.multi_reduction <add>, %166, %cst_58 [1] : vector<16x32xf32> to vector<16xf32>
    %168 = vector.shape_cast %167 : vector<16xf32> to vector<16x1xf32>
    %cst_59 = arith.constant 3.200000e+01 : f32
    %169 = vector.broadcast %cst_59 : f32 to vector<16x1xf32>
    %170 = arith.divf %168, %169 : vector<16x1xf32>
    %171 = vector.broadcast %163 : vector<16x1xf32> to vector<16x32xf32>
    %172 = arith.subf %159, %171 : vector<16x32xf32>
    %cst_60 = arith.constant 9.99999974E-6 : f32
    %173 = vector.broadcast %cst_60 : f32 to vector<16x1xf32>
    %174 = arith.addf %170, %173 : vector<16x1xf32>
    %175 = math.rsqrt %174 : vector<16x1xf32>
    %176 = vector.broadcast %175 : vector<16x1xf32> to vector<16x32xf32>
    %177 = arith.mulf %172, %176 : vector<16x32xf32>
    %c0_61 = arith.constant 0 : index
    %c0_62 = arith.constant 0 : index
    %178 = vector.load %arg8[%c0_61, %c0_62] : memref<1x32xf32, #tpu.memory_space<vmem>>, vector<1x32xf32>
    %179 = vector.broadcast %178 : vector<1x32xf32> to vector<16x32xf32>
    %180 = arith.mulf %177, %179 : vector<16x32xf32>
    %c0_63 = arith.constant 0 : index
    %c0_64 = arith.constant 0 : index
    %181 = vector.load %arg9[%c0_63, %c0_64] : memref<1x32xf32, #tpu.memory_space<vmem>>, vector<1x32xf32>
    %182 = vector.broadcast %181 : vector<1x32xf32> to vector<16x32xf32>
    %183 = arith.addf %180, %182 : vector<16x32xf32>
    %c0_65 = arith.constant 0 : index
    %c0_66 = arith.constant 0 : index
    %184 = vector.load %arg10[%c0_65, %c0_66] : memref<32x64xf32, #tpu.memory_space<vmem>>, vector<32x64xf32>
    %cst_67 = arith.constant dense<0.000000e+00> : vector<16x64xf32>
    %185 = tpu.matmul %183, %184, %cst_67 {dimension_numbers = #tpu.dot_dimension_numbers<[1], [0], [0], [1], [0, 0, 1, 1], [], []>} : vector<16x32xf32>, vector<32x64xf32>, vector<16x64xf32> -> vector<16x64xf32>
    %c0_68 = arith.constant 0 : index
    %c0_69 = arith.constant 0 : index
    %186 = vector.load %arg11[%c0_68, %c0_69] : memref<1x64xf32, #tpu.memory_space<vmem>>, vector<1x64xf32>
    %187 = vector.broadcast %186 : vector<1x64xf32> to vector<16x64xf32>
    %188 = arith.addf %185, %187 : vector<16x64xf32>
    %cst_70 = arith.constant 0.000000e+00 : f32
    %189 = vector.broadcast %cst_70 : f32 to vector<16x64xf32>
    %190 = arith.maximumf %188, %189 : vector<16x64xf32>
    %c0_71 = arith.constant 0 : index
    %c0_72 = arith.constant 0 : index
    %191 = vector.load %arg12[%c0_71, %c0_72] : memref<64x32xf32, #tpu.memory_space<vmem>>, vector<64x32xf32>
    %cst_73 = arith.constant dense<0.000000e+00> : vector<16x32xf32>
    %192 = tpu.matmul %190, %191, %cst_73 {dimension_numbers = #tpu.dot_dimension_numbers<[1], [0], [0], [1], [0, 0, 1, 1], [], []>} : vector<16x64xf32>, vector<64x32xf32>, vector<16x32xf32> -> vector<16x32xf32>
    %193 = arith.addf %183, %192 : vector<16x32xf32>
    %c0_74 = arith.constant 0 : index
    %c0_75 = arith.constant 0 : index
    %194 = vector.load %arg13[%c0_74, %c0_75] : memref<1x32xf32, #tpu.memory_space<vmem>>, vector<1x32xf32>
    %195 = vector.broadcast %194 : vector<1x32xf32> to vector<16x32xf32>
    %196 = arith.addf %193, %195 : vector<16x32xf32>
    %cst_76 = arith.constant dense<0.000000e+00> : vector<16xf32>
    %197 = vector.multi_reduction <add>, %196, %cst_76 [1] : vector<16x32xf32> to vector<16xf32>
    %198 = vector.shape_cast %197 : vector<16xf32> to vector<16x1xf32>
    %cst_77 = arith.constant 3.200000e+01 : f32
    %199 = vector.broadcast %cst_77 : f32 to vector<16x1xf32>
    %200 = arith.divf %198, %199 : vector<16x1xf32>
    %201 = vector.broadcast %200 : vector<16x1xf32> to vector<16x32xf32>
    %202 = arith.subf %196, %201 : vector<16x32xf32>
    %203 = arith.mulf %202, %202 : vector<16x32xf32>
    %cst_78 = arith.constant dense<0.000000e+00> : vector<16xf32>
    %204 = vector.multi_reduction <add>, %203, %cst_78 [1] : vector<16x32xf32> to vector<16xf32>
    %205 = vector.shape_cast %204 : vector<16xf32> to vector<16x1xf32>
    %cst_79 = arith.constant 3.200000e+01 : f32
    %206 = vector.broadcast %cst_79 : f32 to vector<16x1xf32>
    %207 = arith.divf %205, %206 : vector<16x1xf32>
    %208 = vector.broadcast %200 : vector<16x1xf32> to vector<16x32xf32>
    %209 = arith.subf %196, %208 : vector<16x32xf32>
    %cst_80 = arith.constant 9.99999974E-6 : f32
    %210 = vector.broadcast %cst_80 : f32 to vector<16x1xf32>
    %211 = arith.addf %207, %210 : vector<16x1xf32>
    %212 = math.rsqrt %211 : vector<16x1xf32>
    %213 = vector.broadcast %212 : vector<16x1xf32> to vector<16x32xf32>
    %214 = arith.mulf %209, %213 : vector<16x32xf32>
    %c0_81 = arith.constant 0 : index
    %c0_82 = arith.constant 0 : index
    %215 = vector.load %arg14[%c0_81, %c0_82] : memref<1x32xf32, #tpu.memory_space<vmem>>, vector<1x32xf32>
    %216 = vector.broadcast %215 : vector<1x32xf32> to vector<16x32xf32>
    %217 = arith.mulf %214, %216 : vector<16x32xf32>
    %c0_83 = arith.constant 0 : index
    %c0_84 = arith.constant 0 : index
    %218 = vector.load %arg15[%c0_83, %c0_84] : memref<1x32xf32, #tpu.memory_space<vmem>>, vector<1x32xf32>
    %219 = vector.broadcast %218 : vector<1x32xf32> to vector<16x32xf32>
    %220 = arith.addf %217, %219 : vector<16x32xf32>
    %c0_85 = arith.constant 0 : index
    %c0_86 = arith.constant 0 : index
    %221 = vector.load %arg16[%c0_85, %c0_86] : memref<16x32xf32, #tpu.memory_space<vmem>>, vector<16x32xf32>
    tpu.vector_store %arg16[%c0_85, %c0_86], %220 {strides = array<i32>} : memref<16x32xf32, #tpu.memory_space<vmem>>, vector<16x32xf32>,
    return
  }
}

</mosaic_0001>

<llo_original>
// kernel: transformer_encoder_layer.1
$region0: #{transformer_encoder_layer.1}
  #allocation0 [shape = 'u32[]', space=smem, size = 0x4, offset = 0x4, fixed_abs, tag = 'smem constant byte address 0x4 - core index']
  #allocation1 [shape = 'u32[144,128]{1,0:T(1,128)}', space=vmem, size = 0x12000, scoped, tag = 'internal scratch']
  %s0 = inlined_call_operand.vmem [shape: f32[16,32], index: 0, kind: input, shape index: {}]
  %s1 = inlined_call_operand.vmem [shape: f32[16,32], index: 1, kind: input, shape index: {}]
  %s2 = inlined_call_operand.vmem [shape: f32[32,64], index: 2, kind: input, shape index: {}]
  %s3 = inlined_call_operand.vmem [shape: f32[1,64], index: 3, kind: input, shape index: {}]
  %s4 = inlined_call_operand.vmem [shape: f32[32,32], index: 4, kind: input, shape index: {}]
  %s5 = inlined_call_operand.vmem [shape: f32[1,32], index: 5, kind: input, shape index: {}]
  %s6 = inlined_call_operand.vmem [shape: f32[32,32], index: 6, kind: input, shape index: {}]
  %s7 = inlined_call_operand.vmem [shape: f32[1,32], index: 7, kind: input, shape index: {}]
  %s8 = inlined_call_operand.vmem [shape: f32[1,32], index: 8, kind: input, shape index: {}]
  %s9 = inlined_call_operand.vmem [shape: f32[1,32], index: 9, kind: input, shape index: {}]
  %s10 = inlined_call_operand.vmem [shape: f32[32,64], index: 10, kind: input, shape index: {}]
  %s11 = inlined_call_operand.vmem [shape: f32[1,64], index: 11, kind: input, shape index: {}]
  %s12 = inlined_call_operand.vmem [shape: f32[64,32], index: 12, kind: input, shape index: {}]
  %s13 = inlined_call_operand.vmem [shape: f32[1,32], index: 13, kind: input, shape index: {}]
  %s14 = inlined_call_operand.vmem [shape: f32[1,32], index: 14, kind: input, shape index: {}]
  %s15 = inlined_call_operand.vmem [shape: f32[1,32], index: 15, kind: input, shape index: {}]
  %s16 = inlined_call_operand.vmem [shape: f32[16,32], index: 16, kind: output, shape index: {}]
  %s17 = sld [smem:[#allocation0]]
  $region74: #{transformer_encoder_layer.1} parent=0
    _
  %s19 = ssub.s32 1, %s17
  %s20 = scalar_select 0, %s19, %s17
  // Predicated region
  $region2: #{transformer_encoder_layer.1} parent=0 // pred_check
    _
  $region3: #{transformer_encoder_layer.1} parent=0 // pred_check_branch
    %22 = sbr.rel (0) target = $region5
  $region4: #{transformer_encoder_layer.1} parent=0 // pred_region
    _
  $region5: #{transformer_encoder_layer.1} parent=0 // pred_fallthru
    _
  // Predicated region
  $region6: #{transformer_encoder_layer.1} parent=0 // pred_check
    _
  $region7: #{transformer_encoder_layer.1} parent=0 // pred_check_branch
    %24 = sbr.rel (0) target = $region9
  $region8: #{transformer_encoder_layer.1} parent=0 // pred_region
    _
  $region9: #{transformer_encoder_layer.1} parent=0 // pred_fallthru
    _
  // Predicated region
  $region10: #{transformer_encoder_layer.1} parent=0 // pred_check
    _
  $region11: #{transformer_encoder_layer.1} parent=0 // pred_check_branch
    %26 = sbr.rel (0) target = $region13
  $region12: #{transformer_encoder_layer.1} parent=0 // pred_region
    _
  $region13: #{transformer_encoder_layer.1} parent=0 // pred_fallthru
    _
  // Predicated region
  $region14: #{transformer_encoder_layer.1} parent=0 // pred_check
    _
  $region15: #{transformer_encoder_layer.1} parent=0 // pred_check_branch
    %28 = sbr.rel (0) target = $region17
  $region16: #{transformer_encoder_layer.1} parent=0 // pred_region
    _
  $region17: #{transformer_encoder_layer.1} parent=0 // pred_fallthru
    _
  // Predicated region
  $region18: #{transformer_encoder_layer.1} parent=0 // pred_check
    _
  $region19: #{transformer_encoder_layer.1} parent=0 // pred_check_branch
    %30 = sbr.rel (0) target = $region21
  $region20: #{transformer_encoder_layer.1} parent=0 // pred_region
    _
  $region21: #{transformer_encoder_layer.1} parent=0 // pred_fallthru
    _
  // Predicated region
  $region22: #{transformer_encoder_layer.1} parent=0 // pred_check
    _
  $region23: #{transformer_encoder_layer.1} parent=0 // pred_check_branch
    %32 = sbr.rel (0) target = $region25
  $region24: #{transformer_encoder_layer.1} parent=0 // pred_region
    _
  $region25: #{transformer_encoder_layer.1} parent=0 // pred_fallthru
    _
  // Predicated region
  $region26: #{transformer_encoder_layer.1} parent=0 // pred_check
    _
  $region27: #{transformer_encoder_layer.1} parent=0 // pred_check_branch
    %34 = sbr.rel (0) target = $region29
  $region28: #{transformer_encoder_layer.1} parent=0 // pred_region
    _
  $region29: #{transformer_encoder_layer.1} parent=0 // pred_fallthru
    _
  // Predicated region
  $region30: #{transformer_encoder_layer.1} parent=0 // pred_check
    _
  $region31: #{transformer_encoder_layer.1} parent=0 // pred_check_branch
    %36 = sbr.rel (0) target = $region33
  $region32: #{transformer_encoder_layer.1} parent=0 // pred_region
    _
  $region33: #{transformer_encoder_layer.1} parent=0 // pred_fallthru
    _
  // Predicated region
  $region34: #{transformer_encoder_layer.1} parent=0 // pred_check
    _
  $region35: #{transformer_encoder_layer.1} parent=0 // pred_check_branch
    %38 = sbr.rel (0) target = $region37
  $region36: #{transformer_encoder_layer.1} parent=0 // pred_region
    _
  $region37: #{transformer_encoder_layer.1} parent=0 // pred_fallthru
    _
  // Predicated region
  $region38: #{transformer_encoder_layer.1} parent=0 // pred_check
    _
  $region39: #{transformer_encoder_layer.1} parent=0 // pred_check_branch
    %40 = sbr.rel (0) target = $region41
  $region40: #{transformer_encoder_layer.1} parent=0 // pred_region
    _
  $region41: #{transformer_encoder_layer.1} parent=0 // pred_fallthru
    _
  // Predicated region
  $region42: #{transformer_encoder_layer.1} parent=0 // pred_check
    _
  $region43: #{transformer_encoder_layer.1} parent=0 // pred_check_branch
    %42 = sbr.rel (0) target = $region45
  $region44: #{transformer_encoder_layer.1} parent=0 // pred_region
    _
  $region45: #{transformer_encoder_layer.1} parent=0 // pred_fallthru
    _
  // Predicated region
  $region46: #{transformer_encoder_layer.1} parent=0 // pred_check
    _
  $region47: #{transformer_encoder_layer.1} parent=0 // pred_check_branch
    %44 = sbr.rel (0) target = $region49
  $region48: #{transformer_encoder_layer.1} parent=0 // pred_region
    _
  $region49: #{transformer_encoder_layer.1} parent=0 // pred_fallthru
    _
  // Predicated region
  $region50: #{transformer_encoder_layer.1} parent=0 // pred_check
    _
  $region51: #{transformer_encoder_layer.1} parent=0 // pred_check_branch
    %46 = sbr.rel (0) target = $region53
  $region52: #{transformer_encoder_layer.1} parent=0 // pred_region
    _
  $region53: #{transformer_encoder_layer.1} parent=0 // pred_fallthru
    _
  // Predicated region
  $region54: #{transformer_encoder_layer.1} parent=0 // pred_check
    _
  $region55: #{transformer_encoder_layer.1} parent=0 // pred_check_branch
    %48 = sbr.rel (0) target = $region57
  $region56: #{transformer_encoder_layer.1} parent=0 // pred_region
    _
  $region57: #{transformer_encoder_layer.1} parent=0 // pred_fallthru
    _
  // Predicated region
  $region58: #{transformer_encoder_layer.1} parent=0 // pred_check
    _
  $region59: #{transformer_encoder_layer.1} parent=0 // pred_check_branch
    %50 = sbr.rel (0) target = $region61
  $region60: #{transformer_encoder_layer.1} parent=0 // pred_region
    _
  $region61: #{transformer_encoder_layer.1} parent=0 // pred_fallthru
    _
  // Predicated region
  $region62: #{transformer_encoder_layer.1} parent=0 // pred_check
    _
  $region63: #{transformer_encoder_layer.1} parent=0 // pred_check_branch
    %52 = sbr.rel (0) target = $region65
  $region64: #{transformer_encoder_layer.1} parent=0 // pred_region
    _
  $region65: #{transformer_encoder_layer.1} parent=0 // pred_fallthru
    _
  %v53 = vld [vmem:[%s0] sm:$0xff]
  %v54 = vld [vmem:[%s0 + $0x8] sm:$0xff]
  %v55 = vld [vmem:[%s1] sm:$0xff]
  %v56 = vld [vmem:[%s1 + $0x8] sm:$0xff]
  %v57 = vld [vmem:[%s2] sm:$0xff]
  %v58 = vld [vmem:[%s2 + $0x8] sm:$0xff]
  %v59 = vld [vmem:[%s2 + $0x10] sm:$0xff]
  %v60 = vld [vmem:[%s2 + $0x18] sm:$0xff]
  %v61 = vld [vmem:[%s3] sm:$0x1]
  %v63 = vlaneseq
  %v64 = vshrl.u32 %v63, 7
  %v65 = vsub.s32 0, %v64
  %v66 = vrot.slane %v61, %v65
  %vm68 = vcmask 261120
  %v70 = vsel %vm68, %v53, 0
  %v73 = vsel %vm68, %v54, 0
  %75 = vmatprep.subr.mxu0 0.0
  %76 = vmatpush1.msra.mxu0 %v57
  %77 = vmatprep.subr.mxu0 0.0
  %78 = vmatpush1.msra.mxu0 %v58
  %79 = vmatprep.subr.mxu0 0.0
  %80 = vmatpush1.msra.mxu0 %v59
  %81 = vmatprep.subr.mxu0 0.0
  %82 = vmatpush1.msra.mxu0 %v60
  %83 = vmatprep.subr.mxu0 0.0
  %84 = vmatpush1.msra.mxu0 0.0
  %85 = vmatprep.subr.mxu0 0.0
  %86 = vmatpush1.msra.mxu0 0.0
  %87 = vmatprep.subr.mxu0 0.0
  %88 = vmatpush1.msra.mxu0 0.0
  %89 = vmatprep.subr.mxu0 0.0
  %90 = vmatpush1.msra.mxu0 0.0
  %91 = vmatprep.subr.mxu0 0.0
  %92 = vmatpush1.msra.mxu0 0.0
  %93 = vmatprep.subr.mxu0 0.0
  %94 = vmatpush1.msra.mxu0 0.0
  %95 = vmatprep.subr.mxu0 0.0
  %96 = vmatpush1.msra.mxu0 0.0
  %97 = vmatprep.subr.mxu0 0.0
  %98 = vmatpush1.msra.mxu0 0.0
  %99 = vmatprep.subr.mxu0 0.0
  %100 = vmatpush1.msra.mxu0 0.0
  %101 = vmatprep.subr.mxu0 0.0
  %102 = vmatpush1.msra.mxu0 0.0
  %103 = vmatprep.subr.mxu0 0.0
  %104 = vmatpush1.msra.mxu0 0.0
  %105 = vmatprep.subr.mxu0 0.0
  %106 = vmatpush1.msra.mxu0 0.0
  %107 = vmatprep.subr.mxu0 0.0
  %108 = vmatpush1.msra.mxu0 0.0
  %109 = vmatprep.subr.mxu0 0.0
  %110 = vmatpush1.msra.mxu0 0.0
  %111 = vmatprep.subr.mxu0 0.0
  %112 = vmatpush1.msra.mxu0 0.0
  %113 = vmatprep.subr.mxu0 0.0
  %114 = vmatpush1.msra.mxu0 0.0
  %115 = vmatprep.subr.mxu0 0.0
  %116 = vmatpush1.msra.mxu0 0.0
  %117 = vmatprep.subr.mxu0 0.0
  %118 = vmatpush1.msra.mxu0 0.0
  %119 = vmatprep.subr.mxu0 0.0
  %120 = vmatpush1.msra.mxu0 0.0
  %121 = vmatprep.subr.mxu0 0.0
  %122 = vmatpush1.msra.mxu0 0.0
  %123 = vmatprep.subr.mxu0 0.0
  %124 = vmatpush1.msra.mxu0 0.0
  %125 = vmatprep.subr.mxu0 0.0
  %126 = vmatpush1.msra.mxu0 0.0
  %127 = vmatprep.subr.mxu0 0.0
  %128 = vmatpush1.msra.mxu0 0.0
  %129 = vmatprep.subr.mxu0 0.0
  %130 = vmatpush1.msra.mxu0 0.0
  %131 = vmatprep.subr.mxu0 0.0
  %132 = vmatpush1.msra.mxu0 0.0
  %133 = vmatprep.subr.mxu0 0.0
  %134 = vmatpush1.msra.mxu0 0.0
  %135 = vmatprep.subr.mxu0 0.0
  %136 = vmatpush1.msra.mxu0 0.0
  %137 = vmatprep.subr.mxu0 0.0
  %138 = vmatpush1.msra.mxu0 0.0
  %139 = vmatprep.mubr.f32.mxu0 0.0
  %140 = vmatmul.mubr.f32.gmra.mrb[0].mxu0 %v70
  %v141 = vpop.f32.mrb[0].mxu0
  %v142 = vadd.f32 %v66, %v141
  %v143 = vpop.f32.mrb[0].mxu0
  %144 = vmatprep.mubr.f32.mxu0 0.0
  %145 = vmatmul.mubr.f32.gmra.mrb[0].mxu0 %v73
  %v146 = vpop.f32.mrb[0].mxu0
  %v147 = vadd.f32 %v66, %v146
  %v148 = vpop.f32.mrb[0].mxu0
  %149 = vdwg.mxu0
  %v150 = vld [vmem:[%s4] sm:$0xff]
  %v151 = vld [vmem:[%s4 + $0x8] sm:$0xff]
  %v152 = vld [vmem:[%s4 + $0x10] sm:$0xff]
  %v153 = vld [vmem:[%s4 + $0x18] sm:$0xff]
  %v154 = vld [vmem:[%s5] sm:$0x1]
  %v156 = vlaneseq
  %v157 = vshrl.u32 %v156, 7
  %v158 = vsub.s32 0, %v157
  %v159 = vrot.slane %v154, %v158
  %v162 = vsel %vm68, %v55, 0
  %v165 = vsel %vm68, %v56, 0
  %167 = vmatprep.subr.mxu0 0.0
  %168 = vmatpush1.msra.mxu0 %v150
  %169 = vmatprep.subr.mxu0 0.0
  %170 = vmatpush1.msra.mxu0 %v151
  %171 = vmatprep.subr.mxu0 0.0
  %172 = vmatpush1.msra.mxu0 %v152
  %173 = vmatprep.subr.mxu0 0.0
  %174 = vmatpush1.msra.mxu0 %v153
  %175 = vmatprep.subr.mxu0 0.0
  %176 = vmatpush1.msra.mxu0 0.0
  %177 = vmatprep.subr.mxu0 0.0
  %178 = vmatpush1.msra.mxu0 0.0
  %179 = vmatprep.subr.mxu0 0.0
  %180 = vmatpush1.msra.mxu0 0.0
  %181 = vmatprep.subr.mxu0 0.0
  %182 = vmatpush1.msra.mxu0 0.0
  %183 = vmatprep.subr.mxu0 0.0
  %184 = vmatpush1.msra.mxu0 0.0
  %185 = vmatprep.subr.mxu0 0.0
  %186 = vmatpush1.msra.mxu0 0.0
  %187 = vmatprep.subr.mxu0 0.0
  %188 = vmatpush1.msra.mxu0 0.0
  %189 = vmatprep.subr.mxu0 0.0
  %190 = vmatpush1.msra.mxu0 0.0
  %191 = vmatprep.subr.mxu0 0.0
  %192 = vmatpush1.msra.mxu0 0.0
  %193 = vmatprep.subr.mxu0 0.0
  %194 = vmatpush1.msra.mxu0 0.0
  %195 = vmatprep.subr.mxu0 0.0
  %196 = vmatpush1.msra.mxu0 0.0
  %197 = vmatprep.subr.mxu0 0.0
  %198 = vmatpush1.msra.mxu0 0.0
  %199 = vmatprep.subr.mxu0 0.0
  %200 = vmatpush1.msra.mxu0 0.0
  %201 = vmatprep.subr.mxu0 0.0
  %202 = vmatpush1.msra.mxu0 0.0
  %203 = vmatprep.subr.mxu0 0.0
  %204 = vmatpush1.msra.mxu0 0.0
  %205 = vmatprep.subr.mxu0 0.0
  %206 = vmatpush1.msra.mxu0 0.0
  %207 = vmatprep.subr.mxu0 0.0
  %208 = vmatpush1.msra.mxu0 0.0
  %209 = vmatprep.subr.mxu0 0.0
  %210 = vmatpush1.msra.mxu0 0.0
  %211 = vmatprep.subr.mxu0 0.0
  %212 = vmatpush1.msra.mxu0 0.0
  %213 = vmatprep.subr.mxu0 0.0
  %214 = vmatpush1.msra.mxu0 0.0
  %215 = vmatprep.subr.mxu0 0.0
  %216 = vmatpush1.msra.mxu0 0.0
  %217 = vmatprep.subr.mxu0 0.0
  %218 = vmatpush1.msra.mxu0 0.0
  %219 = vmatprep.subr.mxu0 0.0
  %220 = vmatpush1.msra.mxu0 0.0
  %221 = vmatprep.subr.mxu0 0.0
  %222 = vmatpush1.msra.mxu0 0.0
  %223 = vmatprep.subr.mxu0 0.0
  %224 = vmatpush1.msra.mxu0 0.0
  %225 = vmatprep.subr.mxu0 0.0
  %226 = vmatpush1.msra.mxu0 0.0
  %227 = vmatprep.subr.mxu0 0.0
  %228 = vmatpush1.msra.mxu0 0.0
  %229 = vmatprep.subr.mxu0 0.0
  %230 = vmatpush1.msra.mxu0 0.0
  %231 = vmatprep.mubr.f32.mxu0 0.0
  %232 = vmatmul.mubr.f32.gmra.mrb[0].mxu0 %v162
  %v233 = vpop.f32.mrb[0].mxu0
  %v234 = vadd.f32 %v159, %v233
  %v235 = vpop.f32.mrb[0].mxu0
  %236 = vmatprep.mubr.f32.mxu0 0.0
  %237 = vmatmul.mubr.f32.gmra.mrb[0].mxu0 %v165
  %v238 = vpop.f32.mrb[0].mxu0
  %v239 = vadd.f32 %v159, %v238
  %v240 = vpop.f32.mrb[0].mxu0
  %241 = vdwg.mxu0
  %v242 = vld [vmem:[%s6] sm:$0xff]
  %v243 = vld [vmem:[%s6 + $0x8] sm:$0xff]
  %v244 = vld [vmem:[%s6 + $0x10] sm:$0xff]
  %v245 = vld [vmem:[%s6 + $0x18] sm:$0xff]
  %247 = vrot.lane.b32.xlu0 %v142, 96
  %v248 = vpop.permute.xlu0 %247
  %vm249 = vcmask 64512
  %v250 = vsel %vm249, %v142, 0
  %v252 = vsel %vm249, %v248, 0
  %254 = vmatprep.subr.mxu0 0.0
  %255 = vmatpush1.xpose.msra.mxu0 %v252
  %256 = vmatprep.subr.mxu0 0.0
  %257 = vmatpush1.xpose.msra.mxu0 0.0
  %258 = vmatprep.subr.mxu0 0.0
  %259 = vmatpush1.xpose.msra.mxu0 0.0
  %260 = vmatprep.subr.mxu0 0.0
  %261 = vmatpush1.xpose.msra.mxu0 0.0
  %262 = vmatprep.subr.mxu0 0.0
  %263 = vmatpush1.xpose.msra.mxu0 0.0
  %264 = vmatprep.subr.mxu0 0.0
  %265 = vmatpush1.xpose.msra.mxu0 0.0
  %266 = vmatprep.subr.mxu0 0.0
  %267 = vmatpush1.xpose.msra.mxu0 0.0
  %268 = vmatprep.subr.mxu0 0.0
  %269 = vmatpush1.xpose.msra.mxu0 0.0
  %270 = vmatprep.subr.mxu0 0.0
  %271 = vmatpush1.xpose.msra.mxu0 0.0
  %272 = vmatprep.subr.mxu0 0.0
  %273 = vmatpush1.xpose.msra.mxu0 0.0
  %274 = vmatprep.subr.mxu0 0.0
  %275 = vmatpush1.xpose.msra.mxu0 0.0
  %276 = vmatprep.subr.mxu0 0.0
  %277 = vmatpush1.xpose.msra.mxu0 0.0
  %278 = vmatprep.subr.mxu0 0.0
  %279 = vmatpush1.xpose.msra.mxu0 0.0
  %280 = vmatprep.subr.mxu0 0.0
  %281 = vmatpush1.xpose.msra.mxu0 0.0
  %282 = vmatprep.subr.mxu0 0.0
  %283 = vmatpush1.xpose.msra.mxu0 0.0
  %284 = vmatprep.subr.mxu0 0.0
  %285 = vmatpush1.xpose.msra.mxu0 0.0
  %286 = vmatprep.subr.mxu0 0.0
  %287 = vmatpush1.xpose.msra.mxu0 0.0
  %288 = vmatprep.subr.mxu0 0.0
  %289 = vmatpush1.xpose.msra.mxu0 0.0
  %290 = vmatprep.subr.mxu0 0.0
  %291 = vmatpush1.xpose.msra.mxu0 0.0
  %292 = vmatprep.subr.mxu0 0.0
  %293 = vmatpush1.xpose.msra.mxu0 0.0
  %294 = vmatprep.subr.mxu0 0.0
  %295 = vmatpush1.xpose.msra.mxu0 0.0
  %296 = vmatprep.subr.mxu0 0.0
  %297 = vmatpush1.xpose.msra.mxu0 0.0
  %298 = vmatprep.subr.mxu0 0.0
  %299 = vmatpush1.xpose.msra.mxu0 0.0
  %300 = vmatprep.subr.mxu0 0.0
  %301 = vmatpush1.xpose.msra.mxu0 0.0
  %302 = vmatprep.subr.mxu0 0.0
  %303 = vmatpush1.xpose.msra.mxu0 0.0
  %304 = vmatprep.subr.mxu0 0.0
  %305 = vmatpush1.xpose.msra.mxu0 0.0
  %306 = vmatprep.subr.mxu0 0.0
  %307 = vmatpush1.xpose.msra.mxu0 0.0
  %308 = vmatprep.subr.mxu0 0.0
  %309 = vmatpush1.xpose.msra.mxu0 0.0
  %310 = vmatprep.subr.mxu0 0.0
  %311 = vmatpush1.xpose.msra.mxu0 0.0
  %312 = vmatprep.subr.mxu0 0.0
  %313 = vmatpush1.xpose.msra.mxu0 0.0
  %314 = vmatprep.subr.mxu0 0.0
  %315 = vmatpush1.xpose.msra.mxu0 0.0
  %316 = vmatprep.subr.mxu0 0.0
  %317 = vmatpush1.xpose.msra.mxu0 0.0
  %318 = vmatprep.mubr.f32.mxu0 0.0
  %319 = vmatmul.mubr.f32.gmra.mrb[0].mxu0 %v250
  %v320 = vpop.f32.mrb[0].mxu0
  %v321 = vadd.f32 0.0, %v320
  %v322 = vpop.f32.mrb[0].mxu0
  %323 = vdwg.mxu0
  %v324 = vsel %vm249, %v321, -inf
  %325 = vmax.xlane.f32.xlu0 %v324
  %v326 = vpop.xlane.xlu0 %325
  %v327 = vsub.f32 %v321, %v326
  %v328 = vmul.f32 %v327, 1.442695
  %v329 = vpow.pop %v328
  %v330 = vsel %vm249, %v329, 0.0
  %331 = vadd.xlane.f32.xlu0 %v330
  %v332 = vpop.xlane.xlu0 %331
  %v333 = vrcp.pop %v332
  %v334 = vmul.f32 %v329, %v333
  %v336 = vsel %vm249, %v334, 0
  %338 = vmatprep.subr.mxu0 0.0
  %339 = vmatpush1.msra.mxu0 %v234
  %340 = vmatprep.subr.mxu0 0.0
  %341 = vmatpush1.msra.mxu0 0.0
  %342 = vmatprep.subr.mxu0 0.0
  %343 = vmatpush1.msra.mxu0 0.0
  %344 = vmatprep.subr.mxu0 0.0
  %345 = vmatpush1.msra.mxu0 0.0
  %346 = vmatprep.subr.mxu0 0.0
  %347 = vmatpush1.msra.mxu0 0.0
  %348 = vmatprep.subr.mxu0 0.0
  %349 = vmatpush1.msra.mxu0 0.0
  %350 = vmatprep.subr.mxu0 0.0
  %351 = vmatpush1.msra.mxu0 0.0
  %352 = vmatprep.subr.mxu0 0.0
  %353 = vmatpush1.msra.mxu0 0.0
  %354 = vmatprep.subr.mxu0 0.0
  %355 = vmatpush1.msra.mxu0 0.0
  %356 = vmatprep.subr.mxu0 0.0
  %357 = vmatpush1.msra.mxu0 0.0
  %358 = vmatprep.subr.mxu0 0.0
  %359 = vmatpush1.msra.mxu0 0.0
  %360 = vmatprep.subr.mxu0 0.0
  %361 = vmatpush1.msra.mxu0 0.0
  %362 = vmatprep.subr.mxu0 0.0
  %363 = vmatpush1.msra.mxu0 0.0
  %364 = vmatprep.subr.mxu0 0.0
  %365 = vmatpush1.msra.mxu0 0.0
  %366 = vmatprep.subr.mxu0 0.0
  %367 = vmatpush1.msra.mxu0 0.0
  %368 = vmatprep.subr.mxu0 0.0
  %369 = vmatpush1.msra.mxu0 0.0
  %370 = vmatprep.subr.mxu0 0.0
  %371 = vmatpush1.msra.mxu0 0.0
  %372 = vmatprep.subr.mxu0 0.0
  %373 = vmatpush1.msra.mxu0 0.0
  %374 = vmatprep.subr.mxu0 0.0
  %375 = vmatpush1.msra.mxu0 0.0
  %376 = vmatprep.subr.mxu0 0.0
  %377 = vmatpush1.msra.mxu0 0.0
  %378 = vmatprep.subr.mxu0 0.0
  %379 = vmatpush1.msra.mxu0 0.0
  %380 = vmatprep.subr.mxu0 0.0
  %381 = vmatpush1.msra.mxu0 0.0
  %382 = vmatprep.subr.mxu0 0.0
  %383 = vmatpush1.msra.mxu0 0.0
  %384 = vmatprep.subr.mxu0 0.0
  %385 = vmatpush1.msra.mxu0 0.0
  %386 = vmatprep.subr.mxu0 0.0
  %387 = vmatpush1.msra.mxu0 0.0
  %388 = vmatprep.subr.mxu0 0.0
  %389 = vmatpush1.msra.mxu0 0.0
  %390 = vmatprep.subr.mxu0 0.0
  %391 = vmatpush1.msra.mxu0 0.0
  %392 = vmatprep.subr.mxu0 0.0
  %393 = vmatpush1.msra.mxu0 0.0
  %394 = vmatprep.subr.mxu0 0.0
  %395 = vmatpush1.msra.mxu0 0.0
  %396 = vmatprep.subr.mxu0 0.0
  %397 = vmatpush1.msra.mxu0 0.0
  %398 = vmatprep.subr.mxu0 0.0
  %399 = vmatpush1.msra.mxu0 0.0
  %400 = vmatprep.subr.mxu0 0.0
  %401 = vmatpush1.msra.mxu0 0.0
  %402 = vmatprep.mubr.f32.mxu0 0.0
  %403 = vmatmul.mubr.f32.gmra.mrb[0].mxu0 %v336
  %v404 = vpop.f32.mrb[0].mxu0
  %v405 = vadd.f32 0.0, %v404
  %v406 = vpop.f32.mrb[0].mxu0
  %407 = vdwg.mxu0
  %408 = vrot.lane.b32.xlu0 %v142, 120
  %v409 = vpop.permute.xlu0 %408
  %410 = vrot.lane.b32.xlu0 %v142, 88
  %v411 = vpop.permute.xlu0 %410
  %v412 = vsel %vm249, %v409, 0
  %v414 = vsel %vm249, %v411, 0
  %416 = vmatprep.subr.mxu0 0.0
  %417 = vmatpush1.xpose.msra.mxu0 %v414
  %418 = vmatprep.subr.mxu0 0.0
  %419 = vmatpush1.xpose.msra.mxu0 0.0
  %420 = vmatprep.subr.mxu0 0.0
  %421 = vmatpush1.xpose.msra.mxu0 0.0
  %422 = vmatprep.subr.mxu0 0.0
  %423 = vmatpush1.xpose.msra.mxu0 0.0
  %424 = vmatprep.subr.mxu0 0.0
  %425 = vmatpush1.xpose.msra.mxu0 0.0
  %426 = vmatprep.subr.mxu0 0.0
  %427 = vmatpush1.xpose.msra.mxu0 0.0
  %428 = vmatprep.subr.mxu0 0.0
  %429 = vmatpush1.xpose.msra.mxu0 0.0
  %430 = vmatprep.subr.mxu0 0.0
  %431 = vmatpush1.xpose.msra.mxu0 0.0
  %432 = vmatprep.subr.mxu0 0.0
  %433 = vmatpush1.xpose.msra.mxu0 0.0
  %434 = vmatprep.subr.mxu0 0.0
  %435 = vmatpush1.xpose.msra.mxu0 0.0
  %436 = vmatprep.subr.mxu0 0.0
  %437 = vmatpush1.xpose.msra.mxu0 0.0
  %438 = vmatprep.subr.mxu0 0.0
  %439 = vmatpush1.xpose.msra.mxu0 0.0
  %440 = vmatprep.subr.mxu0 0.0
  %441 = vmatpush1.xpose.msra.mxu0 0.0
  %442 = vmatprep.subr.mxu0 0.0
  %443 = vmatpush1.xpose.msra.mxu0 0.0
  %444 = vmatprep.subr.mxu0 0.0
  %445 = vmatpush1.xpose.msra.mxu0 0.0
  %446 = vmatprep.subr.mxu0 0.0
  %447 = vmatpush1.xpose.msra.mxu0 0.0
  %448 = vmatprep.subr.mxu0 0.0
  %449 = vmatpush1.xpose.msra.mxu0 0.0
  %450 = vmatprep.subr.mxu0 0.0
  %451 = vmatpush1.xpose.msra.mxu0 0.0
  %452 = vmatprep.subr.mxu0 0.0
  %453 = vmatpush1.xpose.msra.mxu0 0.0
  %454 = vmatprep.subr.mxu0 0.0
  %455 = vmatpush1.xpose.msra.mxu0 0.0
  %456 = vmatprep.subr.mxu0 0.0
  %457 = vmatpush1.xpose.msra.mxu0 0.0
  %458 = vmatprep.subr.mxu0 0.0
  %459 = vmatpush1.xpose.msra.mxu0 0.0
  %460 = vmatprep.subr.mxu0 0.0
  %461 = vmatpush1.xpose.msra.mxu0 0.0
  %462 = vmatprep.subr.mxu0 0.0
  %463 = vmatpush1.xpose.msra.mxu0 0.0
  %464 = vmatprep.subr.mxu0 0.0
  %465 = vmatpush1.xpose.msra.mxu0 0.0
  %466 = vmatprep.subr.mxu0 0.0
  %467 = vmatpush1.xpose.msra.mxu0 0.0
  %468 = vmatprep.subr.mxu0 0.0
  %469 = vmatpush1.xpose.msra.mxu0 0.0
  %470 = vmatprep.subr.mxu0 0.0
  %471 = vmatpush1.xpose.msra.mxu0 0.0
  %472 = vmatprep.subr.mxu0 0.0
  %473 = vmatpush1.xpose.msra.mxu0 0.0
  %474 = vmatprep.subr.mxu0 0.0
  %475 = vmatpush1.xpose.msra.mxu0 0.0
  %476 = vmatprep.subr.mxu0 0.0
  %477 = vmatpush1.xpose.msra.mxu0 0.0
  %478 = vmatprep.subr.mxu0 0.0
  %479 = vmatpush1.xpose.msra.mxu0 0.0
  %480 = vmatprep.mubr.f32.mxu0 0.0
  %481 = vmatmul.mubr.f32.gmra.mrb[0].mxu0 %v412
  %v482 = vpop.f32.mrb[0].mxu0
  %v483 = vadd.f32 0.0, %v482
  %v484 = vpop.f32.mrb[0].mxu0
  %485 = vdwg.mxu0
  %v486 = vsel %vm249, %v483, -inf
  %487 = vmax.xlane.f32.xlu0 %v486
  %v488 = vpop.xlane.xlu0 %487
  %v489 = vsub.f32 %v483, %v488
  %v490 = vmul.f32 %v489, 1.442695
  %v491 = vpow.pop %v490
  %v492 = vsel %vm249, %v491, 0.0
  %493 = vadd.xlane.f32.xlu0 %v492
  %v494 = vpop.xlane.xlu0 %493
  %v495 = vrcp.pop %v494
  %v496 = vmul.f32 %v491, %v495
  %498 = vrot.lane.b32.xlu0 %v234, 120
  %v499 = vpop.permute.xlu0 %498
  %v502 = vsel %vm249, %v496, 0
  %504 = vmatprep.subr.mxu0 0.0
  %505 = vmatpush1.msra.mxu0 %v499
  %506 = vmatprep.subr.mxu0 0.0
  %507 = vmatpush1.msra.mxu0 0.0
  %508 = vmatprep.subr.mxu0 0.0
  %509 = vmatpush1.msra.mxu0 0.0
  %510 = vmatprep.subr.mxu0 0.0
  %511 = vmatpush1.msra.mxu0 0.0
  %512 = vmatprep.subr.mxu0 0.0
  %513 = vmatpush1.msra.mxu0 0.0
  %514 = vmatprep.subr.mxu0 0.0
  %515 = vmatpush1.msra.mxu0 0.0
  %516 = vmatprep.subr.mxu0 0.0
  %517 = vmatpush1.msra.mxu0 0.0
  %518 = vmatprep.subr.mxu0 0.0
  %519 = vmatpush1.msra.mxu0 0.0
  %520 = vmatprep.subr.mxu0 0.0
  %521 = vmatpush1.msra.mxu0 0.0
  %522 = vmatprep.subr.mxu0 0.0
  %523 = vmatpush1.msra.mxu0 0.0
  %524 = vmatprep.subr.mxu0 0.0
  %525 = vmatpush1.msra.mxu0 0.0
  %526 = vmatprep.subr.mxu0 0.0
  %527 = vmatpush1.msra.mxu0 0.0
  %528 = vmatprep.subr.mxu0 0.0
  %529 = vmatpush1.msra.mxu0 0.0
  %530 = vmatprep.subr.mxu0 0.0
  %531 = vmatpush1.msra.mxu0 0.0
  %532 = vmatprep.subr.mxu0 0.0
  %533 = vmatpush1.msra.mxu0 0.0
  %534 = vmatprep.subr.mxu0 0.0
  %535 = vmatpush1.msra.mxu0 0.0
  %536 = vmatprep.subr.mxu0 0.0
  %537 = vmatpush1.msra.mxu0 0.0
  %538 = vmatprep.subr.mxu0 0.0
  %539 = vmatpush1.msra.mxu0 0.0
  %540 = vmatprep.subr.mxu0 0.0
  %541 = vmatpush1.msra.mxu0 0.0
  %542 = vmatprep.subr.mxu0 0.0
  %543 = vmatpush1.msra.mxu0 0.0
  %544 = vmatprep.subr.mxu0 0.0
  %545 = vmatpush1.msra.mxu0 0.0
  %546 = vmatprep.subr.mxu0 0.0
  %547 = vmatpush1.msra.mxu0 0.0
  %548 = vmatprep.subr.mxu0 0.0
  %549 = vmatpush1.msra.mxu0 0.0
  %550 = vmatprep.subr.mxu0 0.0
  %551 = vmatpush1.msra.mxu0 0.0
  %552 = vmatprep.subr.mxu0 0.0
  %553 = vmatpush1.msra.mxu0 0.0
  %554 = vmatprep.subr.mxu0 0.0
  %555 = vmatpush1.msra.mxu0 0.0
  %556 = vmatprep.subr.mxu0 0.0
  %557 = vmatpush1.msra.mxu0 0.0
  %558 = vmatprep.subr.mxu0 0.0
  %559 = vmatpush1.msra.mxu0 0.0
  %560 = vmatprep.subr.mxu0 0.0
  %561 = vmatpush1.msra.mxu0 0.0
  %562 = vmatprep.subr.mxu0 0.0
  %563 = vmatpush1.msra.mxu0 0.0
  %564 = vmatprep.subr.mxu0 0.0
  %565 = vmatpush1.msra.mxu0 0.0
  %566 = vmatprep.subr.mxu0 0.0
  %567 = vmatpush1.msra.mxu0 0.0
  %568 = vmatprep.mubr.f32.mxu0 0.0
  %569 = vmatmul.mubr.f32.gmra.mrb[0].mxu0 %v502
  %v570 = vpop.f32.mrb[0].mxu0
  %v571 = vadd.f32 0.0, %v570
  %v572 = vpop.f32.mrb[0].mxu0
  %573 = vdwg.mxu0
  %v575 = vsel %vm249, %v571, 0
  %577 = vmatprep.subr.mxu0 0.0
  %578 = vmatpush1.msra.mxu0 %v243
  %579 = vmatprep.subr.mxu0 0.0
  %580 = vmatpush1.msra.mxu0 0.0
  %581 = vmatprep.subr.mxu0 0.0
  %582 = vmatpush1.msra.mxu0 0.0
  %583 = vmatprep.subr.mxu0 0.0
  %584 = vmatpush1.msra.mxu0 0.0
  %585 = vmatprep.subr.mxu0 0.0
  %586 = vmatpush1.msra.mxu0 0.0
  %587 = vmatprep.subr.mxu0 0.0
  %588 = vmatpush1.msra.mxu0 0.0
  %589 = vmatprep.subr.mxu0 0.0
  %590 = vmatpush1.msra.mxu0 0.0
  %591 = vmatprep.subr.mxu0 0.0
  %592 = vmatpush1.msra.mxu0 0.0
  %593 = vmatprep.subr.mxu0 0.0
  %594 = vmatpush1.msra.mxu0 0.0
  %595 = vmatprep.subr.mxu0 0.0
  %596 = vmatpush1.msra.mxu0 0.0
  %597 = vmatprep.subr.mxu0 0.0
  %598 = vmatpush1.msra.mxu0 0.0
  %599 = vmatprep.subr.mxu0 0.0
  %600 = vmatpush1.msra.mxu0 0.0
  %601 = vmatprep.subr.mxu0 0.0
  %602 = vmatpush1.msra.mxu0 0.0
  %603 = vmatprep.subr.mxu0 0.0
  %604 = vmatpush1.msra.mxu0 0.0
  %605 = vmatprep.subr.mxu0 0.0
  %606 = vmatpush1.msra.mxu0 0.0
  %607 = vmatprep.subr.mxu0 0.0
  %608 = vmatpush1.msra.mxu0 0.0
  %609 = vmatprep.subr.mxu0 0.0
  %610 = vmatpush1.msra.mxu0 0.0
  %611 = vmatprep.subr.mxu0 0.0
  %612 = vmatpush1.msra.mxu0 0.0
  %613 = vmatprep.subr.mxu0 0.0
  %614 = vmatpush1.msra.mxu0 0.0
  %615 = vmatprep.subr.mxu0 0.0
  %616 = vmatpush1.msra.mxu0 0.0
  %617 = vmatprep.subr.mxu0 0.0
  %618 = vmatpush1.msra.mxu0 0.0
  %619 = vmatprep.subr.mxu0 0.0
  %620 = vmatpush1.msra.mxu0 0.0
  %621 = vmatprep.subr.mxu0 0.0
  %622 = vmatpush1.msra.mxu0 0.0
  %623 = vmatprep.subr.mxu0 0.0
  %624 = vmatpush1.msra.mxu0 0.0
  %625 = vmatprep.subr.mxu0 0.0
  %626 = vmatpush1.msra.mxu0 0.0
  %627 = vmatprep.subr.mxu0 0.0
  %628 = vmatpush1.msra.mxu0 0.0
  %629 = vmatprep.subr.mxu0 0.0
  %630 = vmatpush1.msra.mxu0 0.0
  %631 = vmatprep.subr.mxu0 0.0
  %632 = vmatpush1.msra.mxu0 0.0
  %633 = vmatprep.subr.mxu0 0.0
  %634 = vmatpush1.msra.mxu0 0.0
  %635 = vmatprep.subr.mxu0 0.0
  %636 = vmatpush1.msra.mxu0 0.0
  %637 = vmatprep.subr.mxu0 0.0
  %638 = vmatpush1.msra.mxu0 0.0
  %639 = vmatprep.subr.mxu0 0.0
  %640 = vmatpush1.msra.mxu0 0.0
  %641 = vmatprep.mubr.f32.mxu0 0.0
  %642 = vmatmul.mubr.f32.gmra.mrb[0].mxu0 %v575
  %v643 = vpop.f32.mrb[0].mxu0
  %v644 = vadd.f32 0.0, %v643
  %v645 = vpop.f32.mrb[0].mxu0
  %646 = vdwg.mxu0
  %v648 = vsel %vm249, %v405, 0
  %650 = vmatprep.subr.mxu0 0.0
  %651 = vmatpush1.msra.mxu0 %v242
  %652 = vmatprep.subr.mxu0 0.0
  %653 = vmatpush1.msra.mxu0 0.0
  %654 = vmatprep.subr.mxu0 0.0
  %655 = vmatpush1.msra.mxu0 0.0
  %656 = vmatprep.subr.mxu0 0.0
  %657 = vmatpush1.msra.mxu0 0.0
  %658 = vmatprep.subr.mxu0 0.0
  %659 = vmatpush1.msra.mxu0 0.0
  %660 = vmatprep.subr.mxu0 0.0
  %661 = vmatpush1.msra.mxu0 0.0
  %662 = vmatprep.subr.mxu0 0.0
  %663 = vmatpush1.msra.mxu0 0.0
  %664 = vmatprep.subr.mxu0 0.0
  %665 = vmatpush1.msra.mxu0 0.0
  %666 = vmatprep.subr.mxu0 0.0
  %667 = vmatpush1.msra.mxu0 0.0
  %668 = vmatprep.subr.mxu0 0.0
  %669 = vmatpush1.msra.mxu0 0.0
  %670 = vmatprep.subr.mxu0 0.0
  %671 = vmatpush1.msra.mxu0 0.0
  %672 = vmatprep.subr.mxu0 0.0
  %673 = vmatpush1.msra.mxu0 0.0
  %674 = vmatprep.subr.mxu0 0.0
  %675 = vmatpush1.msra.mxu0 0.0
  %676 = vmatprep.subr.mxu0 0.0
  %677 = vmatpush1.msra.mxu0 0.0
  %678 = vmatprep.subr.mxu0 0.0
  %679 = vmatpush1.msra.mxu0 0.0
  %680 = vmatprep.subr.mxu0 0.0
  %681 = vmatpush1.msra.mxu0 0.0
  %682 = vmatprep.subr.mxu0 0.0
  %683 = vmatpush1.msra.mxu0 0.0
  %684 = vmatprep.subr.mxu0 0.0
  %685 = vmatpush1.msra.mxu0 0.0
  %686 = vmatprep.subr.mxu0 0.0
  %687 = vmatpush1.msra.mxu0 0.0
  %688 = vmatprep.subr.mxu0 0.0
  %689 = vmatpush1.msra.mxu0 0.0
  %690 = vmatprep.subr.mxu0 0.0
  %691 = vmatpush1.msra.mxu0 0.0
  %692 = vmatprep.subr.mxu0 0.0
  %693 = vmatpush1.msra.mxu0 0.0
  %694 = vmatprep.subr.mxu0 0.0
  %695 = vmatpush1.msra.mxu0 0.0
  %696 = vmatprep.subr.mxu0 0.0
  %697 = vmatpush1.msra.mxu0 0.0
  %698 = vmatprep.subr.mxu0 0.0
  %699 = vmatpush1.msra.mxu0 0.0
  %700 = vmatprep.subr.mxu0 0.0
  %701 = vmatpush1.msra.mxu0 0.0
  %702 = vmatprep.subr.mxu0 0.0
  %703 = vmatpush1.msra.mxu0 0.0
  %704 = vmatprep.subr.mxu0 0.0
  %705 = vmatpush1.msra.mxu0 0.0
  %706 = vmatprep.subr.mxu0 0.0
  %707 = vmatpush1.msra.mxu0 0.0
  %708 = vmatprep.subr.mxu0 0.0
  %709 = vmatpush1.msra.mxu0 0.0
  %710 = vmatprep.subr.mxu0 0.0
  %711 = vmatpush1.msra.mxu0 0.0
  %712 = vmatprep.subr.mxu0 0.0
  %713 = vmatpush1.msra.mxu0 0.0
  %714 = vmatprep.mubr.f32.mxu0 0.0
  %715 = vmatmul.mubr.f32.gmra.mrb[0].mxu0 %v648
  %v716 = vpop.f32.mrb[0].mxu0
  %v717 = vadd.f32 %v644, %v716
  %v718 = vpop.f32.mrb[0].mxu0
  %719 = vdwg.mxu0
  %720 = vrot.lane.b32.xlu0 %v142, 112
  %v721 = vpop.permute.xlu0 %720
  %722 = vrot.lane.b32.xlu0 %v142, 80
  %v723 = vpop.permute.xlu0 %722
  %v724 = vsel %vm249, %v721, 0
  %v726 = vsel %vm249, %v723, 0
  %728 = vmatprep.subr.mxu0 0.0
  %729 = vmatpush1.xpose.msra.mxu0 %v726
  %730 = vmatprep.subr.mxu0 0.0
  %731 = vmatpush1.xpose.msra.mxu0 0.0
  %732 = vmatprep.subr.mxu0 0.0
  %733 = vmatpush1.xpose.msra.mxu0 0.0
  %734 = vmatprep.subr.mxu0 0.0
  %735 = vmatpush1.xpose.msra.mxu0 0.0
  %736 = vmatprep.subr.mxu0 0.0
  %737 = vmatpush1.xpose.msra.mxu0 0.0
  %738 = vmatprep.subr.mxu0 0.0
  %739 = vmatpush1.xpose.msra.mxu0 0.0
  %740 = vmatprep.subr.mxu0 0.0
  %741 = vmatpush1.xpose.msra.mxu0 0.0
  %742 = vmatprep.subr.mxu0 0.0
  %743 = vmatpush1.xpose.msra.mxu0 0.0
  %744 = vmatprep.subr.mxu0 0.0
  %745 = vmatpush1.xpose.msra.mxu0 0.0
  %746 = vmatprep.subr.mxu0 0.0
  %747 = vmatpush1.xpose.msra.mxu0 0.0
  %748 = vmatprep.subr.mxu0 0.0
  %749 = vmatpush1.xpose.msra.mxu0 0.0
  %750 = vmatprep.subr.mxu0 0.0
  %751 = vmatpush1.xpose.msra.mxu0 0.0
  %752 = vmatprep.subr.mxu0 0.0
  %753 = vmatpush1.xpose.msra.mxu0 0.0
  %754 = vmatprep.subr.mxu0 0.0
  %755 = vmatpush1.xpose.msra.mxu0 0.0
  %756 = vmatprep.subr.mxu0 0.0
  %757 = vmatpush1.xpose.msra.mxu0 0.0
  %758 = vmatprep.subr.mxu0 0.0
  %759 = vmatpush1.xpose.msra.mxu0 0.0
  %760 = vmatprep.subr.mxu0 0.0
  %761 = vmatpush1.xpose.msra.mxu0 0.0
  %762 = vmatprep.subr.mxu0 0.0
  %763 = vmatpush1.xpose.msra.mxu0 0.0
  %764 = vmatprep.subr.mxu0 0.0
  %765 = vmatpush1.xpose.msra.mxu0 0.0
  %766 = vmatprep.subr.mxu0 0.0
  %767 = vmatpush1.xpose.msra.mxu0 0.0
  %768 = vmatprep.subr.mxu0 0.0
  %769 = vmatpush1.xpose.msra.mxu0 0.0
  %770 = vmatprep.subr.mxu0 0.0
  %771 = vmatpush1.xpose.msra.mxu0 0.0
  %772 = vmatprep.subr.mxu0 0.0
  %773 = vmatpush1.xpose.msra.mxu0 0.0
  %774 = vmatprep.subr.mxu0 0.0
  %775 = vmatpush1.xpose.msra.mxu0 0.0
  %776 = vmatprep.subr.mxu0 0.0
  %777 = vmatpush1.xpose.msra.mxu0 0.0
  %778 = vmatprep.subr.mxu0 0.0
  %779 = vmatpush1.xpose.msra.mxu0 0.0
  %780 = vmatprep.subr.mxu0 0.0
  %781 = vmatpush1.xpose.msra.mxu0 0.0
  %782 = vmatprep.subr.mxu0 0.0
  %783 = vmatpush1.xpose.msra.mxu0 0.0
  %784 = vmatprep.subr.mxu0 0.0
  %785 = vmatpush1.xpose.msra.mxu0 0.0
  %786 = vmatprep.subr.mxu0 0.0
  %787 = vmatpush1.xpose.msra.mxu0 0.0
  %788 = vmatprep.subr.mxu0 0.0
  %789 = vmatpush1.xpose.msra.mxu0 0.0
  %790 = vmatprep.subr.mxu0 0.0
  %791 = vmatpush1.xpose.msra.mxu0 0.0
  %792 = vmatprep.mubr.f32.mxu0 0.0
  %793 = vmatmul.mubr.f32.gmra.mrb[0].mxu0 %v724
  %v794 = vpop.f32.mrb[0].mxu0
  %v795 = vadd.f32 0.0, %v794
  %v796 = vpop.f32.mrb[0].mxu0
  %797 = vdwg.mxu0
  %v798 = vsel %vm249, %v795, -inf
  %799 = vmax.xlane.f32.xlu0 %v798
  %v800 = vpop.xlane.xlu0 %799
  %v801 = vsub.f32 %v795, %v800
  %v802 = vmul.f32 %v801, 1.442695
  %v803 = vpow.pop %v802
  %v804 = vsel %vm249, %v803, 0.0
  %805 = vadd.xlane.f32.xlu0 %v804
  %v806 = vpop.xlane.xlu0 %805
  %v807 = vrcp.pop %v806
  %v808 = vmul.f32 %v803, %v807
  %809 = vrot.lane.b32.xlu0 %v234, 112
  %v810 = vpop.permute.xlu0 %809
  %v813 = vsel %vm249, %v808, 0
  %815 = vmatprep.subr.mxu0 0.0
  %816 = vmatpush1.msra.mxu0 %v810
  %817 = vmatprep.subr.mxu0 0.0
  %818 = vmatpush1.msra.mxu0 0.0
  %819 = vmatprep.subr.mxu0 0.0
  %820 = vmatpush1.msra.mxu0 0.0
  %821 = vmatprep.subr.mxu0 0.0
  %822 = vmatpush1.msra.mxu0 0.0
  %823 = vmatprep.subr.mxu0 0.0
  %824 = vmatpush1.msra.mxu0 0.0
  %825 = vmatprep.subr.mxu0 0.0
  %826 = vmatpush1.msra.mxu0 0.0
  %827 = vmatprep.subr.mxu0 0.0
  %828 = vmatpush1.msra.mxu0 0.0
  %829 = vmatprep.subr.mxu0 0.0
  %830 = vmatpush1.msra.mxu0 0.0
  %831 = vmatprep.subr.mxu0 0.0
  %832 = vmatpush1.msra.mxu0 0.0
  %833 = vmatprep.subr.mxu0 0.0
  %834 = vmatpush1.msra.mxu0 0.0
  %835 = vmatprep.subr.mxu0 0.0
  %836 = vmatpush1.msra.mxu0 0.0
  %837 = vmatprep.subr.mxu0 0.0
  %838 = vmatpush1.msra.mxu0 0.0
  %839 = vmatprep.subr.mxu0 0.0
  %840 = vmatpush1.msra.mxu0 0.0
  %841 = vmatprep.subr.mxu0 0.0
  %842 = vmatpush1.msra.mxu0 0.0
  %843 = vmatprep.subr.mxu0 0.0
  %844 = vmatpush1.msra.mxu0 0.0
  %845 = vmatprep.subr.mxu0 0.0
  %846 = vmatpush1.msra.mxu0 0.0
  %847 = vmatprep.subr.mxu0 0.0
  %848 = vmatpush1.msra.mxu0 0.0
  %849 = vmatprep.subr.mxu0 0.0
  %850 = vmatpush1.msra.mxu0 0.0
  %851 = vmatprep.subr.mxu0 0.0
  %852 = vmatpush1.msra.mxu0 0.0
  %853 = vmatprep.subr.mxu0 0.0
  %854 = vmatpush1.msra.mxu0 0.0
  %855 = vmatprep.subr.mxu0 0.0
  %856 = vmatpush1.msra.mxu0 0.0
  %857 = vmatprep.subr.mxu0 0.0
  %858 = vmatpush1.msra.mxu0 0.0
  %859 = vmatprep.subr.mxu0 0.0
  %860 = vmatpush1.msra.mxu0 0.0
  %861 = vmatprep.subr.mxu0 0.0
  %862 = vmatpush1.msra.mxu0 0.0
  %863 = vmatprep.subr.mxu0 0.0
  %864 = vmatpush1.msra.mxu0 0.0
  %865 = vmatprep.subr.mxu0 0.0
  %866 = vmatpush1.msra.mxu0 0.0
  %867 = vmatprep.subr.mxu0 0.0
  %868 = vmatpush1.msra.mxu0 0.0
  %869 = vmatprep.subr.mxu0 0.0
  %870 = vmatpush1.msra.mxu0 0.0
  %871 = vmatprep.subr.mxu0 0.0
  %872 = vmatpush1.msra.mxu0 0.0
  %873 = vmatprep.subr.mxu0 0.0
  %874 = vmatpush1.msra.mxu0 0.0
  %875 = vmatprep.subr.mxu0 0.0
  %876 = vmatpush1.msra.mxu0 0.0
  %877 = vmatprep.subr.mxu0 0.0
  %878 = vmatpush1.msra.mxu0 0.0
  %879 = vmatprep.mubr.f32.mxu0 0.0
  %880 = vmatmul.mubr.f32.gmra.mrb[0].mxu0 %v813
  %v881 = vpop.f32.mrb[0].mxu0
  %v882 = vadd.f32 0.0, %v881
  %v883 = vpop.f32.mrb[0].mxu0
  %884 = vdwg.mxu0
  %v886 = vsel %vm249, %v882, 0
  %888 = vmatprep.subr.mxu0 0.0
  %889 = vmatpush1.msra.mxu0 %v244
  %890 = vmatprep.subr.mxu0 0.0
  %891 = vmatpush1.msra.mxu0 0.0
  %892 = vmatprep.subr.mxu0 0.0
  %893 = vmatpush1.msra.mxu0 0.0
  %894 = vmatprep.subr.mxu0 0.0
  %895 = vmatpush1.msra.mxu0 0.0
  %896 = vmatprep.subr.mxu0 0.0
  %897 = vmatpush1.msra.mxu0 0.0
  %898 = vmatprep.subr.mxu0 0.0
  %899 = vmatpush1.msra.mxu0 0.0
  %900 = vmatprep.subr.mxu0 0.0
  %901 = vmatpush1.msra.mxu0 0.0
  %902 = vmatprep.subr.mxu0 0.0
  %903 = vmatpush1.msra.mxu0 0.0
  %904 = vmatprep.subr.mxu0 0.0
  %905 = vmatpush1.msra.mxu0 0.0
  %906 = vmatprep.subr.mxu0 0.0
  %907 = vmatpush1.msra.mxu0 0.0
  %908 = vmatprep.subr.mxu0 0.0
  %909 = vmatpush1.msra.mxu0 0.0
  %910 = vmatprep.subr.mxu0 0.0
  %911 = vmatpush1.msra.mxu0 0.0
  %912 = vmatprep.subr.mxu0 0.0
  %913 = vmatpush1.msra.mxu0 0.0
  %914 = vmatprep.subr.mxu0 0.0
  %915 = vmatpush1.msra.mxu0 0.0
  %916 = vmatprep.subr.mxu0 0.0
  %917 = vmatpush1.msra.mxu0 0.0
  %918 = vmatprep.subr.mxu0 0.0
  %919 = vmatpush1.msra.mxu0 0.0
  %920 = vmatprep.subr.mxu0 0.0
  %921 = vmatpush1.msra.mxu0 0.0
  %922 = vmatprep.subr.mxu0 0.0
  %923 = vmatpush1.msra.mxu0 0.0
  %924 = vmatprep.subr.mxu0 0.0
  %925 = vmatpush1.msra.mxu0 0.0
  %926 = vmatprep.subr.mxu0 0.0
  %927 = vmatpush1.msra.mxu0 0.0
  %928 = vmatprep.subr.mxu0 0.0
  %929 = vmatpush1.msra.mxu0 0.0
  %930 = vmatprep.subr.mxu0 0.0
  %931 = vmatpush1.msra.mxu0 0.0
  %932 = vmatprep.subr.mxu0 0.0
  %933 = vmatpush1.msra.mxu0 0.0
  %934 = vmatprep.subr.mxu0 0.0
  %935 = vmatpush1.msra.mxu0 0.0
  %936 = vmatprep.subr.mxu0 0.0
  %937 = vmatpush1.msra.mxu0 0.0
  %938 = vmatprep.subr.mxu0 0.0
  %939 = vmatpush1.msra.mxu0 0.0
  %940 = vmatprep.subr.mxu0 0.0
  %941 = vmatpush1.msra.mxu0 0.0
  %942 = vmatprep.subr.mxu0 0.0
  %943 = vmatpush1.msra.mxu0 0.0
  %944 = vmatprep.subr.mxu0 0.0
  %945 = vmatpush1.msra.mxu0 0.0
  %946 = vmatprep.subr.mxu0 0.0
  %947 = vmatpush1.msra.mxu0 0.0
  %948 = vmatprep.subr.mxu0 0.0
  %949 = vmatpush1.msra.mxu0 0.0
  %950 = vmatprep.subr.mxu0 0.0
  %951 = vmatpush1.msra.mxu0 0.0
  %952 = vmatprep.mubr.f32.mxu0 0.0
  %953 = vmatmul.mubr.f32.gmra.mrb[0].mxu0 %v886
  %v954 = vpop.f32.mrb[0].mxu0
  %v955 = vadd.f32 0.0, %v954
  %v956 = vpop.f32.mrb[0].mxu0
  %957 = vdwg.mxu0
  %v958 = vadd.f32 %v717, %v955
  %959 = vrot.lane.b32.xlu0 %v142, 104
  %v960 = vpop.permute.xlu0 %959
  %961 = vrot.lane.b32.xlu0 %v142, 72
  %v962 = vpop.permute.xlu0 %961
  %v963 = vsel %vm249, %v960, 0
  %v965 = vsel %vm249, %v962, 0
  %967 = vmatprep.subr.mxu0 0.0
  %968 = vmatpush1.xpose.msra.mxu0 %v965
  %969 = vmatprep.subr.mxu0 0.0
  %970 = vmatpush1.xpose.msra.mxu0 0.0
  %971 = vmatprep.subr.mxu0 0.0
  %972 = vmatpush1.xpose.msra.mxu0 0.0
  %973 = vmatprep.subr.mxu0 0.0
  %974 = vmatpush1.xpose.msra.mxu0 0.0
  %975 = vmatprep.subr.mxu0 0.0
  %976 = vmatpush1.xpose.msra.mxu0 0.0
  %977 = vmatprep.subr.mxu0 0.0
  %978 = vmatpush1.xpose.msra.mxu0 0.0
  %979 = vmatprep.subr.mxu0 0.0
  %980 = vmatpush1.xpose.msra.mxu0 0.0
  %981 = vmatprep.subr.mxu0 0.0
  %982 = vmatpush1.xpose.msra.mxu0 0.0
  %983 = vmatprep.subr.mxu0 0.0
  %984 = vmatpush1.xpose.msra.mxu0 0.0
  %985 = vmatprep.subr.mxu0 0.0
  %986 = vmatpush1.xpose.msra.mxu0 0.0
  %987 = vmatprep.subr.mxu0 0.0
  %988 = vmatpush1.xpose.msra.mxu0 0.0
  %989 = vmatprep.subr.mxu0 0.0
  %990 = vmatpush1.xpose.msra.mxu0 0.0
  %991 = vmatprep.subr.mxu0 0.0
  %992 = vmatpush1.xpose.msra.mxu0 0.0
  %993 = vmatprep.subr.mxu0 0.0
  %994 = vmatpush1.xpose.msra.mxu0 0.0
  %995 = vmatprep.subr.mxu0 0.0
  %996 = vmatpush1.xpose.msra.mxu0 0.0
  %997 = vmatprep.subr.mxu0 0.0
  %998 = vmatpush1.xpose.msra.mxu0 0.0
  %999 = vmatprep.subr.mxu0 0.0
  %1000 = vmatpush1.xpose.msra.mxu0 0.0
  %1001 = vmatprep.subr.mxu0 0.0
  %1002 = vmatpush1.xpose.msra.mxu0 0.0
  %1003 = vmatprep.subr.mxu0 0.0
  %1004 = vmatpush1.xpose.msra.mxu0 0.0
  %1005 = vmatprep.subr.mxu0 0.0
  %1006 = vmatpush1.xpose.msra.mxu0 0.0
  %1007 = vmatprep.subr.mxu0 0.0
  %1008 = vmatpush1.xpose.msra.mxu0 0.0
  %1009 = vmatprep.subr.mxu0 0.0
  %1010 = vmatpush1.xpose.msra.mxu0 0.0
  %1011 = vmatprep.subr.mxu0 0.0
  %1012 = vmatpush1.xpose.msra.mxu0 0.0
  %1013 = vmatprep.subr.mxu0 0.0
  %1014 = vmatpush1.xpose.msra.mxu0 0.0
  %1015 = vmatprep.subr.mxu0 0.0
  %1016 = vmatpush1.xpose.msra.mxu0 0.0
  %1017 = vmatprep.subr.mxu0 0.0
  %1018 = vmatpush1.xpose.msra.mxu0 0.0
  %1019 = vmatprep.subr.mxu0 0.0
  %1020 = vmatpush1.xpose.msra.mxu0 0.0
  %1021 = vmatprep.subr.mxu0 0.0
  %1022 = vmatpush1.xpose.msra.mxu0 0.0
  %1023 = vmatprep.subr.mxu0 0.0
  %1024 = vmatpush1.xpose.msra.mxu0 0.0
  %1025 = vmatprep.subr.mxu0 0.0
  %1026 = vmatpush1.xpose.msra.mxu0 0.0
  %1027 = vmatprep.subr.mxu0 0.0
  %1028 = vmatpush1.xpose.msra.mxu0 0.0
  %1029 = vmatprep.subr.mxu0 0.0
  %1030 = vmatpush1.xpose.msra.mxu0 0.0
  %1031 = vmatprep.mubr.f32.mxu0 0.0
  %1032 = vmatmul.mubr.f32.gmra.mrb[0].mxu0 %v963
  %v1033 = vpop.f32.mrb[0].mxu0
  %v1034 = vadd.f32 0.0, %v1033
  %v1035 = vpop.f32.mrb[0].mxu0
  %1036 = vdwg.mxu0
  %v1037 = vsel %vm249, %v1034, -inf
  %1038 = vmax.xlane.f32.xlu0 %v1037
  %v1039 = vpop.xlane.xlu0 %1038
  %v1040 = vsub.f32 %v1034, %v1039
  %v1041 = vmul.f32 %v1040, 1.442695
  %v1042 = vpow.pop %v1041
  %v1043 = vsel %vm249, %v1042, 0.0
  %1044 = vadd.xlane.f32.xlu0 %v1043
  %v1045 = vpop.xlane.xlu0 %1044
  %v1046 = vrcp.pop %v1045
  %v1047 = vmul.f32 %v1042, %v1046
  %1048 = vrot.lane.b32.xlu0 %v234, 104
  %v1049 = vpop.permute.xlu0 %1048
  %v1052 = vsel %vm249, %v1047, 0
  %1054 = vmatprep.subr.mxu0 0.0
  %1055 = vmatpush1.msra.mxu0 %v1049
  %1056 = vmatprep.subr.mxu0 0.0
  %1057 = vmatpush1.msra.mxu0 0.0
  %1058 = vmatprep.subr.mxu0 0.0
  %1059 = vmatpush1.msra.mxu0 0.0
  %1060 = vmatprep.subr.mxu0 0.0
  %1061 = vmatpush1.msra.mxu0 0.0
  %1062 = vmatprep.subr.mxu0 0.0
  %1063 = vmatpush1.msra.mxu0 0.0
  %1064 = vmatprep.subr.mxu0 0.0
  %1065 = vmatpush1.msra.mxu0 0.0
  %1066 = vmatprep.subr.mxu0 0.0
  %1067 = vmatpush1.msra.mxu0 0.0
  %1068 = vmatprep.subr.mxu0 0.0
  %1069 = vmatpush1.msra.mxu0 0.0
  %1070 = vmatprep.subr.mxu0 0.0
  %1071 = vmatpush1.msra.mxu0 0.0
  %1072 = vmatprep.subr.mxu0 0.0
  %1073 = vmatpush1.msra.mxu0 0.0
  %1074 = vmatprep.subr.mxu0 0.0
  %1075 = vmatpush1.msra.mxu0 0.0
  %1076 = vmatprep.subr.mxu0 0.0
  %1077 = vmatpush1.msra.mxu0 0.0
  %1078 = vmatprep.subr.mxu0 0.0
  %1079 = vmatpush1.msra.mxu0 0.0
  %1080 = vmatprep.subr.mxu0 0.0
  %1081 = vmatpush1.msra.mxu0 0.0
  %1082 = vmatprep.subr.mxu0 0.0
  %1083 = vmatpush1.msra.mxu0 0.0
  %1084 = vmatprep.subr.mxu0 0.0
  %1085 = vmatpush1.msra.mxu0 0.0
  %1086 = vmatprep.subr.mxu0 0.0
  %1087 = vmatpush1.msra.mxu0 0.0
  %1088 = vmatprep.subr.mxu0 0.0
  %1089 = vmatpush1.msra.mxu0 0.0
  %1090 = vmatprep.subr.mxu0 0.0
  %1091 = vmatpush1.msra.mxu0 0.0
  %1092 = vmatprep.subr.mxu0 0.0
  %1093 = vmatpush1.msra.mxu0 0.0
  %1094 = vmatprep.subr.mxu0 0.0
  %1095 = vmatpush1.msra.mxu0 0.0
  %1096 = vmatprep.subr.mxu0 0.0
  %1097 = vmatpush1.msra.mxu0 0.0
  %1098 = vmatprep.subr.mxu0 0.0
  %1099 = vmatpush1.msra.mxu0 0.0
  %1100 = vmatprep.subr.mxu0 0.0
  %1101 = vmatpush1.msra.mxu0 0.0
  %1102 = vmatprep.subr.mxu0 0.0
  %1103 = vmatpush1.msra.mxu0 0.0
  %1104 = vmatprep.subr.mxu0 0.0
  %1105 = vmatpush1.msra.mxu0 0.0
  %1106 = vmatprep.subr.mxu0 0.0
  %1107 = vmatpush1.msra.mxu0 0.0
  %1108 = vmatprep.subr.mxu0 0.0
  %1109 = vmatpush1.msra.mxu0 0.0
  %1110 = vmatprep.subr.mxu0 0.0
  %1111 = vmatpush1.msra.mxu0 0.0
  %1112 = vmatprep.subr.mxu0 0.0
  %1113 = vmatpush1.msra.mxu0 0.0
  %1114 = vmatprep.subr.mxu0 0.0
  %1115 = vmatpush1.msra.mxu0 0.0
  %1116 = vmatprep.subr.mxu0 0.0
  %1117 = vmatpush1.msra.mxu0 0.0
  %1118 = vmatprep.mubr.f32.mxu0 0.0
  %1119 = vmatmul.mubr.f32.gmra.mrb[0].mxu0 %v1052
  %v1120 = vpop.f32.mrb[0].mxu0
  %v1121 = vadd.f32 0.0, %v1120
  %v1122 = vpop.f32.mrb[0].mxu0
  %1123 = vdwg.mxu0
  %v1125 = vsel %vm249, %v1121, 0
  %1127 = vmatprep.subr.mxu0 0.0
  %1128 = vmatpush1.msra.mxu0 %v245
  %1129 = vmatprep.subr.mxu0 0.0
  %1130 = vmatpush1.msra.mxu0 0.0
  %1131 = vmatprep.subr.mxu0 0.0
  %1132 = vmatpush1.msra.mxu0 0.0
  %1133 = vmatprep.subr.mxu0 0.0
  %1134 = vmatpush1.msra.mxu0 0.0
  %1135 = vmatprep.subr.mxu0 0.0
  %1136 = vmatpush1.msra.mxu0 0.0
  %1137 = vmatprep.subr.mxu0 0.0
  %1138 = vmatpush1.msra.mxu0 0.0
  %1139 = vmatprep.subr.mxu0 0.0
  %1140 = vmatpush1.msra.mxu0 0.0
  %1141 = vmatprep.subr.mxu0 0.0
  %1142 = vmatpush1.msra.mxu0 0.0
  %1143 = vmatprep.subr.mxu0 0.0
  %1144 = vmatpush1.msra.mxu0 0.0
  %1145 = vmatprep.subr.mxu0 0.0
  %1146 = vmatpush1.msra.mxu0 0.0
  %1147 = vmatprep.subr.mxu0 0.0
  %1148 = vmatpush1.msra.mxu0 0.0
  %1149 = vmatprep.subr.mxu0 0.0
  %1150 = vmatpush1.msra.mxu0 0.0
  %1151 = vmatprep.subr.mxu0 0.0
  %1152 = vmatpush1.msra.mxu0 0.0
  %1153 = vmatprep.subr.mxu0 0.0
  %1154 = vmatpush1.msra.mxu0 0.0
  %1155 = vmatprep.subr.mxu0 0.0
  %1156 = vmatpush1.msra.mxu0 0.0
  %1157 = vmatprep.subr.mxu0 0.0
  %1158 = vmatpush1.msra.mxu0 0.0
  %1159 = vmatprep.subr.mxu0 0.0
  %1160 = vmatpush1.msra.mxu0 0.0
  %1161 = vmatprep.subr.mxu0 0.0
  %1162 = vmatpush1.msra.mxu0 0.0
  %1163 = vmatprep.subr.mxu0 0.0
  %1164 = vmatpush1.msra.mxu0 0.0
  %1165 = vmatprep.subr.mxu0 0.0
  %1166 = vmatpush1.msra.mxu0 0.0
  %1167 = vmatprep.subr.mxu0 0.0
  %1168 = vmatpush1.msra.mxu0 0.0
  %1169 = vmatprep.subr.mxu0 0.0
  %1170 = vmatpush1.msra.mxu0 0.0
  %1171 = vmatprep.subr.mxu0 0.0
  %1172 = vmatpush1.msra.mxu0 0.0
  %1173 = vmatprep.subr.mxu0 0.0
  %1174 = vmatpush1.msra.mxu0 0.0
  %1175 = vmatprep.subr.mxu0 0.0
  %1176 = vmatpush1.msra.mxu0 0.0
  %1177 = vmatprep.subr.mxu0 0.0
  %1178 = vmatpush1.msra.mxu0 0.0
  %1179 = vmatprep.subr.mxu0 0.0
  %1180 = vmatpush1.msra.mxu0 0.0
  %1181 = vmatprep.subr.mxu0 0.0
  %1182 = vmatpush1.msra.mxu0 0.0
  %1183 = vmatprep.subr.mxu0 0.0
  %1184 = vmatpush1.msra.mxu0 0.0
  %1185 = vmatprep.subr.mxu0 0.0
  %1186 = vmatpush1.msra.mxu0 0.0
  %1187 = vmatprep.subr.mxu0 0.0
  %1188 = vmatpush1.msra.mxu0 0.0
  %1189 = vmatprep.subr.mxu0 0.0
  %1190 = vmatpush1.msra.mxu0 0.0
  %1191 = vmatprep.mubr.f32.mxu0 0.0
  %1192 = vmatmul.mubr.f32.gmra.mrb[0].mxu0 %v1125
  %v1193 = vpop.f32.mrb[0].mxu0
  %v1194 = vadd.f32 0.0, %v1193
  %v1195 = vpop.f32.mrb[0].mxu0
  %1196 = vdwg.mxu0
  %v1197 = vadd.f32 %v958, %v1194
  %1199 = vrot.lane.b32.xlu0 %v147, 96
  %v1200 = vpop.permute.xlu0 %1199
  %v1201 = vsel %vm249, %v147, 0
  %v1203 = vsel %vm249, %v1200, 0
  %1205 = vmatprep.subr.mxu0 0.0
  %1206 = vmatpush1.xpose.msra.mxu0 %v1203
  %1207 = vmatprep.subr.mxu0 0.0
  %1208 = vmatpush1.xpose.msra.mxu0 0.0
  %1209 = vmatprep.subr.mxu0 0.0
  %1210 = vmatpush1.xpose.msra.mxu0 0.0
  %1211 = vmatprep.subr.mxu0 0.0
  %1212 = vmatpush1.xpose.msra.mxu0 0.0
  %1213 = vmatprep.subr.mxu0 0.0
  %1214 = vmatpush1.xpose.msra.mxu0 0.0
  %1215 = vmatprep.subr.mxu0 0.0
  %1216 = vmatpush1.xpose.msra.mxu0 0.0
  %1217 = vmatprep.subr.mxu0 0.0
  %1218 = vmatpush1.xpose.msra.mxu0 0.0
  %1219 = vmatprep.subr.mxu0 0.0
  %1220 = vmatpush1.xpose.msra.mxu0 0.0
  %1221 = vmatprep.subr.mxu0 0.0
  %1222 = vmatpush1.xpose.msra.mxu0 0.0
  %1223 = vmatprep.subr.mxu0 0.0
  %1224 = vmatpush1.xpose.msra.mxu0 0.0
  %1225 = vmatprep.subr.mxu0 0.0
  %1226 = vmatpush1.xpose.msra.mxu0 0.0
  %1227 = vmatprep.subr.mxu0 0.0
  %1228 = vmatpush1.xpose.msra.mxu0 0.0
  %1229 = vmatprep.subr.mxu0 0.0
  %1230 = vmatpush1.xpose.msra.mxu0 0.0
  %1231 = vmatprep.subr.mxu0 0.0
  %1232 = vmatpush1.xpose.msra.mxu0 0.0
  %1233 = vmatprep.subr.mxu0 0.0
  %1234 = vmatpush1.xpose.msra.mxu0 0.0
  %1235 = vmatprep.subr.mxu0 0.0
  %1236 = vmatpush1.xpose.msra.mxu0 0.0
  %1237 = vmatprep.subr.mxu0 0.0
  %1238 = vmatpush1.xpose.msra.mxu0 0.0
  %1239 = vmatprep.subr.mxu0 0.0
  %1240 = vmatpush1.xpose.msra.mxu0 0.0
  %1241 = vmatprep.subr.mxu0 0.0
  %1242 = vmatpush1.xpose.msra.mxu0 0.0
  %1243 = vmatprep.subr.mxu0 0.0
  %1244 = vmatpush1.xpose.msra.mxu0 0.0
  %1245 = vmatprep.subr.mxu0 0.0
  %1246 = vmatpush1.xpose.msra.mxu0 0.0
  %1247 = vmatprep.subr.mxu0 0.0
  %1248 = vmatpush1.xpose.msra.mxu0 0.0
  %1249 = vmatprep.subr.mxu0 0.0
  %1250 = vmatpush1.xpose.msra.mxu0 0.0
  %1251 = vmatprep.subr.mxu0 0.0
  %1252 = vmatpush1.xpose.msra.mxu0 0.0
  %1253 = vmatprep.subr.mxu0 0.0
  %1254 = vmatpush1.xpose.msra.mxu0 0.0
  %1255 = vmatprep.subr.mxu0 0.0
  %1256 = vmatpush1.xpose.msra.mxu0 0.0
  %1257 = vmatprep.subr.mxu0 0.0
  %1258 = vmatpush1.xpose.msra.mxu0 0.0
  %1259 = vmatprep.subr.mxu0 0.0
  %1260 = vmatpush1.xpose.msra.mxu0 0.0
  %1261 = vmatprep.subr.mxu0 0.0
  %1262 = vmatpush1.xpose.msra.mxu0 0.0
  %1263 = vmatprep.subr.mxu0 0.0
  %1264 = vmatpush1.xpose.msra.mxu0 0.0
  %1265 = vmatprep.subr.mxu0 0.0
  %1266 = vmatpush1.xpose.msra.mxu0 0.0
  %1267 = vmatprep.subr.mxu0 0.0
  %1268 = vmatpush1.xpose.msra.mxu0 0.0
  %1269 = vmatprep.mubr.f32.mxu0 0.0
  %1270 = vmatmul.mubr.f32.gmra.mrb[0].mxu0 %v1201
  %v1271 = vpop.f32.mrb[0].mxu0
  %v1272 = vadd.f32 0.0, %v1271
  %v1273 = vpop.f32.mrb[0].mxu0
  %1274 = vdwg.mxu0
  %v1275 = vsel %vm249, %v1272, -inf
  %1276 = vmax.xlane.f32.xlu0 %v1275
  %v1277 = vpop.xlane.xlu0 %1276
  %v1278 = vsub.f32 %v1272, %v1277
  %v1279 = vmul.f32 %v1278, 1.442695
  %v1280 = vpow.pop %v1279
  %v1281 = vsel %vm249, %v1280, 0.0
  %1282 = vadd.xlane.f32.xlu0 %v1281
  %v1283 = vpop.xlane.xlu0 %1282
  %v1284 = vrcp.pop %v1283
  %v1285 = vmul.f32 %v1280, %v1284
  %v1287 = vsel %vm249, %v1285, 0
  %1289 = vmatprep.subr.mxu0 0.0
  %1290 = vmatpush1.msra.mxu0 %v239
  %1291 = vmatprep.subr.mxu0 0.0
  %1292 = vmatpush1.msra.mxu0 0.0
  %1293 = vmatprep.subr.mxu0 0.0
  %1294 = vmatpush1.msra.mxu0 0.0
  %1295 = vmatprep.subr.mxu0 0.0
  %1296 = vmatpush1.msra.mxu0 0.0
  %1297 = vmatprep.subr.mxu0 0.0
  %1298 = vmatpush1.msra.mxu0 0.0
  %1299 = vmatprep.subr.mxu0 0.0
  %1300 = vmatpush1.msra.mxu0 0.0
  %1301 = vmatprep.subr.mxu0 0.0
  %1302 = vmatpush1.msra.mxu0 0.0
  %1303 = vmatprep.subr.mxu0 0.0
  %1304 = vmatpush1.msra.mxu0 0.0
  %1305 = vmatprep.subr.mxu0 0.0
  %1306 = vmatpush1.msra.mxu0 0.0
  %1307 = vmatprep.subr.mxu0 0.0
  %1308 = vmatpush1.msra.mxu0 0.0
  %1309 = vmatprep.subr.mxu0 0.0
  %1310 = vmatpush1.msra.mxu0 0.0
  %1311 = vmatprep.subr.mxu0 0.0
  %1312 = vmatpush1.msra.mxu0 0.0
  %1313 = vmatprep.subr.mxu0 0.0
  %1314 = vmatpush1.msra.mxu0 0.0
  %1315 = vmatprep.subr.mxu0 0.0
  %1316 = vmatpush1.msra.mxu0 0.0
  %1317 = vmatprep.subr.mxu0 0.0
  %1318 = vmatpush1.msra.mxu0 0.0
  %1319 = vmatprep.subr.mxu0 0.0
  %1320 = vmatpush1.msra.mxu0 0.0
  %1321 = vmatprep.subr.mxu0 0.0
  %1322 = vmatpush1.msra.mxu0 0.0
  %1323 = vmatprep.subr.mxu0 0.0
  %1324 = vmatpush1.msra.mxu0 0.0
  %1325 = vmatprep.subr.mxu0 0.0
  %1326 = vmatpush1.msra.mxu0 0.0
  %1327 = vmatprep.subr.mxu0 0.0
  %1328 = vmatpush1.msra.mxu0 0.0
  %1329 = vmatprep.subr.mxu0 0.0
  %1330 = vmatpush1.msra.mxu0 0.0
  %1331 = vmatprep.subr.mxu0 0.0
  %1332 = vmatpush1.msra.mxu0 0.0
  %1333 = vmatprep.subr.mxu0 0.0
  %1334 = vmatpush1.msra.mxu0 0.0
  %1335 = vmatprep.subr.mxu0 0.0
  %1336 = vmatpush1.msra.mxu0 0.0
  %1337 = vmatprep.subr.mxu0 0.0
  %1338 = vmatpush1.msra.mxu0 0.0
  %1339 = vmatprep.subr.mxu0 0.0
  %1340 = vmatpush1.msra.mxu0 0.0
  %1341 = vmatprep.subr.mxu0 0.0
  %1342 = vmatpush1.msra.mxu0 0.0
  %1343 = vmatprep.subr.mxu0 0.0
  %1344 = vmatpush1.msra.mxu0 0.0
  %1345 = vmatprep.subr.mxu0 0.0
  %1346 = vmatpush1.msra.mxu0 0.0
  %1347 = vmatprep.subr.mxu0 0.0
  %1348 = vmatpush1.msra.mxu0 0.0
  %1349 = vmatprep.subr.mxu0 0.0
  %1350 = vmatpush1.msra.mxu0 0.0
  %1351 = vmatprep.subr.mxu0 0.0
  %1352 = vmatpush1.msra.mxu0 0.0
  %1353 = vmatprep.mubr.f32.mxu0 0.0
  %1354 = vmatmul.mubr.f32.gmra.mrb[0].mxu0 %v1287
  %v1355 = vpop.f32.mrb[0].mxu0
  %v1356 = vadd.f32 0.0, %v1355
  %v1357 = vpop.f32.mrb[0].mxu0
  %1358 = vdwg.mxu0
  %1359 = vrot.lane.b32.xlu0 %v147, 120
  %v1360 = vpop.permute.xlu0 %1359
  %1361 = vrot.lane.b32.xlu0 %v147, 88
  %v1362 = vpop.permute.xlu0 %1361
  %v1363 = vsel %vm249, %v1360, 0
  %v1365 = vsel %vm249, %v1362, 0
  %1367 = vmatprep.subr.mxu0 0.0
  %1368 = vmatpush1.xpose.msra.mxu0 %v1365
  %1369 = vmatprep.subr.mxu0 0.0
  %1370 = vmatpush1.xpose.msra.mxu0 0.0
  %1371 = vmatprep.subr.mxu0 0.0
  %1372 = vmatpush1.xpose.msra.mxu0 0.0
  %1373 = vmatprep.subr.mxu0 0.0
  %1374 = vmatpush1.xpose.msra.mxu0 0.0
  %1375 = vmatprep.subr.mxu0 0.0
  %1376 = vmatpush1.xpose.msra.mxu0 0.0
  %1377 = vmatprep.subr.mxu0 0.0
  %1378 = vmatpush1.xpose.msra.mxu0 0.0
  %1379 = vmatprep.subr.mxu0 0.0
  %1380 = vmatpush1.xpose.msra.mxu0 0.0
  %1381 = vmatprep.subr.mxu0 0.0
  %1382 = vmatpush1.xpose.msra.mxu0 0.0
  %1383 = vmatprep.subr.mxu0 0.0
  %1384 = vmatpush1.xpose.msra.mxu0 0.0
  %1385 = vmatprep.subr.mxu0 0.0
  %1386 = vmatpush1.xpose.msra.mxu0 0.0
  %1387 = vmatprep.subr.mxu0 0.0
  %1388 = vmatpush1.xpose.msra.mxu0 0.0
  %1389 = vmatprep.subr.mxu0 0.0
  %1390 = vmatpush1.xpose.msra.mxu0 0.0
  %1391 = vmatprep.subr.mxu0 0.0
  %1392 = vmatpush1.xpose.msra.mxu0 0.0
  %1393 = vmatprep.subr.mxu0 0.0
  %1394 = vmatpush1.xpose.msra.mxu0 0.0
  %1395 = vmatprep.subr.mxu0 0.0
  %1396 = vmatpush1.xpose.msra.mxu0 0.0
  %1397 = vmatprep.subr.mxu0 0.0
  %1398 = vmatpush1.xpose.msra.mxu0 0.0
  %1399 = vmatprep.subr.mxu0 0.0
  %1400 = vmatpush1.xpose.msra.mxu0 0.0
  %1401 = vmatprep.subr.mxu0 0.0
  %1402 = vmatpush1.xpose.msra.mxu0 0.0
  %1403 = vmatprep.subr.mxu0 0.0
  %1404 = vmatpush1.xpose.msra.mxu0 0.0
  %1405 = vmatprep.subr.mxu0 0.0
  %1406 = vmatpush1.xpose.msra.mxu0 0.0
  %1407 = vmatprep.subr.mxu0 0.0
  %1408 = vmatpush1.xpose.msra.mxu0 0.0
  %1409 = vmatprep.subr.mxu0 0.0
  %1410 = vmatpush1.xpose.msra.mxu0 0.0
  %1411 = vmatprep.subr.mxu0 0.0
  %1412 = vmatpush1.xpose.msra.mxu0 0.0
  %1413 = vmatprep.subr.mxu0 0.0
  %1414 = vmatpush1.xpose.msra.mxu0 0.0
  %1415 = vmatprep.subr.mxu0 0.0
  %1416 = vmatpush1.xpose.msra.mxu0 0.0
  %1417 = vmatprep.subr.mxu0 0.0
  %1418 = vmatpush1.xpose.msra.mxu0 0.0
  %1419 = vmatprep.subr.mxu0 0.0
  %1420 = vmatpush1.xpose.msra.mxu0 0.0
  %1421 = vmatprep.subr.mxu0 0.0
  %1422 = vmatpush1.xpose.msra.mxu0 0.0
  %1423 = vmatprep.subr.mxu0 0.0
  %1424 = vmatpush1.xpose.msra.mxu0 0.0
  %1425 = vmatprep.subr.mxu0 0.0
  %1426 = vmatpush1.xpose.msra.mxu0 0.0
  %1427 = vmatprep.subr.mxu0 0.0
  %1428 = vmatpush1.xpose.msra.mxu0 0.0
  %1429 = vmatprep.subr.mxu0 0.0
  %1430 = vmatpush1.xpose.msra.mxu0 0.0
  %1431 = vmatprep.mubr.f32.mxu0 0.0
  %1432 = vmatmul.mubr.f32.gmra.mrb[0].mxu0 %v1363
  %v1433 = vpop.f32.mrb[0].mxu0
  %v1434 = vadd.f32 0.0, %v1433
  %v1435 = vpop.f32.mrb[0].mxu0
  %1436 = vdwg.mxu0
  %v1437 = vsel %vm249, %v1434, -inf
  %1438 = vmax.xlane.f32.xlu0 %v1437
  %v1439 = vpop.xlane.xlu0 %1438
  %v1440 = vsub.f32 %v1434, %v1439
  %v1441 = vmul.f32 %v1440, 1.442695
  %v1442 = vpow.pop %v1441
  %v1443 = vsel %vm249, %v1442, 0.0
  %1444 = vadd.xlane.f32.xlu0 %v1443
  %v1445 = vpop.xlane.xlu0 %1444
  %v1446 = vrcp.pop %v1445
  %v1447 = vmul.f32 %v1442, %v1446
  %1449 = vrot.lane.b32.xlu0 %v239, 120
  %v1450 = vpop.permute.xlu0 %1449
  %v1453 = vsel %vm249, %v1447, 0
  %1455 = vmatprep.subr.mxu0 0.0
  %1456 = vmatpush1.msra.mxu0 %v1450
  %1457 = vmatprep.subr.mxu0 0.0
  %1458 = vmatpush1.msra.mxu0 0.0
  %1459 = vmatprep.subr.mxu0 0.0
  %1460 = vmatpush1.msra.mxu0 0.0
  %1461 = vmatprep.subr.mxu0 0.0
  %1462 = vmatpush1.msra.mxu0 0.0
  %1463 = vmatprep.subr.mxu0 0.0
  %1464 = vmatpush1.msra.mxu0 0.0
  %1465 = vmatprep.subr.mxu0 0.0
  %1466 = vmatpush1.msra.mxu0 0.0
  %1467 = vmatprep.subr.mxu0 0.0
  %1468 = vmatpush1.msra.mxu0 0.0
  %1469 = vmatprep.subr.mxu0 0.0
  %1470 = vmatpush1.msra.mxu0 0.0
  %1471 = vmatprep.subr.mxu0 0.0
  %1472 = vmatpush1.msra.mxu0 0.0
  %1473 = vmatprep.subr.mxu0 0.0
  %1474 = vmatpush1.msra.mxu0 0.0
  %1475 = vmatprep.subr.mxu0 0.0
  %1476 = vmatpush1.msra.mxu0 0.0
  %1477 = vmatprep.subr.mxu0 0.0
  %1478 = vmatpush1.msra.mxu0 0.0
  %1479 = vmatprep.subr.mxu0 0.0
  %1480 = vmatpush1.msra.mxu0 0.0
  %1481 = vmatprep.subr.mxu0 0.0
  %1482 = vmatpush1.msra.mxu0 0.0
  %1483 = vmatprep.subr.mxu0 0.0
  %1484 = vmatpush1.msra.mxu0 0.0
  %1485 = vmatprep.subr.mxu0 0.0
  %1486 = vmatpush1.msra.mxu0 0.0
  %1487 = vmatprep.subr.mxu0 0.0
  %1488 = vmatpush1.msra.mxu0 0.0
  %1489 = vmatprep.subr.mxu0 0.0
  %1490 = vmatpush1.msra.mxu0 0.0
  %1491 = vmatprep.subr.mxu0 0.0
  %1492 = vmatpush1.msra.mxu0 0.0
  %1493 = vmatprep.subr.mxu0 0.0
  %1494 = vmatpush1.msra.mxu0 0.0
  %1495 = vmatprep.subr.mxu0 0.0
  %1496 = vmatpush1.msra.mxu0 0.0
  %1497 = vmatprep.subr.mxu0 0.0
  %1498 = vmatpush1.msra.mxu0 0.0
  %1499 = vmatprep.subr.mxu0 0.0
  %1500 = vmatpush1.msra.mxu0 0.0
  %1501 = vmatprep.subr.mxu0 0.0
  %1502 = vmatpush1.msra.mxu0 0.0
  %1503 = vmatprep.subr.mxu0 0.0
  %1504 = vmatpush1.msra.mxu0 0.0
  %1505 = vmatprep.subr.mxu0 0.0
  %1506 = vmatpush1.msra.mxu0 0.0
  %1507 = vmatprep.subr.mxu0 0.0
  %1508 = vmatpush1.msra.mxu0 0.0
  %1509 = vmatprep.subr.mxu0 0.0
  %1510 = vmatpush1.msra.mxu0 0.0
  %1511 = vmatprep.subr.mxu0 0.0
  %1512 = vmatpush1.msra.mxu0 0.0
  %1513 = vmatprep.subr.mxu0 0.0
  %1514 = vmatpush1.msra.mxu0 0.0
  %1515 = vmatprep.subr.mxu0 0.0
  %1516 = vmatpush1.msra.mxu0 0.0
  %1517 = vmatprep.subr.mxu0 0.0
  %1518 = vmatpush1.msra.mxu0 0.0
  %1519 = vmatprep.mubr.f32.mxu0 0.0
  %1520 = vmatmul.mubr.f32.gmra.mrb[0].mxu0 %v1453
  %v1521 = vpop.f32.mrb[0].mxu0
  %v1522 = vadd.f32 0.0, %v1521
  %v1523 = vpop.f32.mrb[0].mxu0
  %1524 = vdwg.mxu0
  %v1526 = vsel %vm249, %v1522, 0
  %1528 = vmatprep.subr.mxu0 0.0
  %1529 = vmatpush1.msra.mxu0 %v243
  %1530 = vmatprep.subr.mxu0 0.0
  %1531 = vmatpush1.msra.mxu0 0.0
  %1532 = vmatprep.subr.mxu0 0.0
  %1533 = vmatpush1.msra.mxu0 0.0
  %1534 = vmatprep.subr.mxu0 0.0
  %1535 = vmatpush1.msra.mxu0 0.0
  %1536 = vmatprep.subr.mxu0 0.0
  %1537 = vmatpush1.msra.mxu0 0.0
  %1538 = vmatprep.subr.mxu0 0.0
  %1539 = vmatpush1.msra.mxu0 0.0
  %1540 = vmatprep.subr.mxu0 0.0
  %1541 = vmatpush1.msra.mxu0 0.0
  %1542 = vmatprep.subr.mxu0 0.0
  %1543 = vmatpush1.msra.mxu0 0.0
  %1544 = vmatprep.subr.mxu0 0.0
  %1545 = vmatpush1.msra.mxu0 0.0
  %1546 = vmatprep.subr.mxu0 0.0
  %1547 = vmatpush1.msra.mxu0 0.0
  %1548 = vmatprep.subr.mxu0 0.0
  %1549 = vmatpush1.msra.mxu0 0.0
  %1550 = vmatprep.subr.mxu0 0.0
  %1551 = vmatpush1.msra.mxu0 0.0
  %1552 = vmatprep.subr.mxu0 0.0
  %1553 = vmatpush1.msra.mxu0 0.0
  %1554 = vmatprep.subr.mxu0 0.0
  %1555 = vmatpush1.msra.mxu0 0.0
  %1556 = vmatprep.subr.mxu0 0.0
  %1557 = vmatpush1.msra.mxu0 0.0
  %1558 = vmatprep.subr.mxu0 0.0
  %1559 = vmatpush1.msra.mxu0 0.0
  %1560 = vmatprep.subr.mxu0 0.0
  %1561 = vmatpush1.msra.mxu0 0.0
  %1562 = vmatprep.subr.mxu0 0.0
  %1563 = vmatpush1.msra.mxu0 0.0
  %1564 = vmatprep.subr.mxu0 0.0
  %1565 = vmatpush1.msra.mxu0 0.0
  %1566 = vmatprep.subr.mxu0 0.0
  %1567 = vmatpush1.msra.mxu0 0.0
  %1568 = vmatprep.subr.mxu0 0.0
  %1569 = vmatpush1.msra.mxu0 0.0
  %1570 = vmatprep.subr.mxu0 0.0
  %1571 = vmatpush1.msra.mxu0 0.0
  %1572 = vmatprep.subr.mxu0 0.0
  %1573 = vmatpush1.msra.mxu0 0.0
  %1574 = vmatprep.subr.mxu0 0.0
  %1575 = vmatpush1.msra.mxu0 0.0
  %1576 = vmatprep.subr.mxu0 0.0
  %1577 = vmatpush1.msra.mxu0 0.0
  %1578 = vmatprep.subr.mxu0 0.0
  %1579 = vmatpush1.msra.mxu0 0.0
  %1580 = vmatprep.subr.mxu0 0.0
  %1581 = vmatpush1.msra.mxu0 0.0
  %1582 = vmatprep.subr.mxu0 0.0
  %1583 = vmatpush1.msra.mxu0 0.0
  %1584 = vmatprep.subr.mxu0 0.0
  %1585 = vmatpush1.msra.mxu0 0.0
  %1586 = vmatprep.subr.mxu0 0.0
  %1587 = vmatpush1.msra.mxu0 0.0
  %1588 = vmatprep.subr.mxu0 0.0
  %1589 = vmatpush1.msra.mxu0 0.0
  %1590 = vmatprep.subr.mxu0 0.0
  %1591 = vmatpush1.msra.mxu0 0.0
  %1592 = vmatprep.mubr.f32.mxu0 0.0
  %1593 = vmatmul.mubr.f32.gmra.mrb[0].mxu0 %v1526
  %v1594 = vpop.f32.mrb[0].mxu0
  %v1595 = vadd.f32 0.0, %v1594
  %v1596 = vpop.f32.mrb[0].mxu0
  %1597 = vdwg.mxu0
  %v1599 = vsel %vm249, %v1356, 0
  %1601 = vmatprep.subr.mxu0 0.0
  %1602 = vmatpush1.msra.mxu0 %v242
  %1603 = vmatprep.subr.mxu0 0.0
  %1604 = vmatpush1.msra.mxu0 0.0
  %1605 = vmatprep.subr.mxu0 0.0
  %1606 = vmatpush1.msra.mxu0 0.0
  %1607 = vmatprep.subr.mxu0 0.0
  %1608 = vmatpush1.msra.mxu0 0.0
  %1609 = vmatprep.subr.mxu0 0.0
  %1610 = vmatpush1.msra.mxu0 0.0
  %1611 = vmatprep.subr.mxu0 0.0
  %1612 = vmatpush1.msra.mxu0 0.0
  %1613 = vmatprep.subr.mxu0 0.0
  %1614 = vmatpush1.msra.mxu0 0.0
  %1615 = vmatprep.subr.mxu0 0.0
  %1616 = vmatpush1.msra.mxu0 0.0
  %1617 = vmatprep.subr.mxu0 0.0
  %1618 = vmatpush1.msra.mxu0 0.0
  %1619 = vmatprep.subr.mxu0 0.0
  %1620 = vmatpush1.msra.mxu0 0.0
  %1621 = vmatprep.subr.mxu0 0.0
  %1622 = vmatpush1.msra.mxu0 0.0
  %1623 = vmatprep.subr.mxu0 0.0
  %1624 = vmatpush1.msra.mxu0 0.0
  %1625 = vmatprep.subr.mxu0 0.0
  %1626 = vmatpush1.msra.mxu0 0.0
  %1627 = vmatprep.subr.mxu0 0.0
  %1628 = vmatpush1.msra.mxu0 0.0
  %1629 = vmatprep.subr.mxu0 0.0
  %1630 = vmatpush1.msra.mxu0 0.0
  %1631 = vmatprep.subr.mxu0 0.0
  %1632 = vmatpush1.msra.mxu0 0.0
  %1633 = vmatprep.subr.mxu0 0.0
  %1634 = vmatpush1.msra.mxu0 0.0
  %1635 = vmatprep.subr.mxu0 0.0
  %1636 = vmatpush1.msra.mxu0 0.0
  %1637 = vmatprep.subr.mxu0 0.0
  %1638 = vmatpush1.msra.mxu0 0.0
  %1639 = vmatprep.subr.mxu0 0.0
  %1640 = vmatpush1.msra.mxu0 0.0
  %1641 = vmatprep.subr.mxu0 0.0
  %1642 = vmatpush1.msra.mxu0 0.0
  %1643 = vmatprep.subr.mxu0 0.0
  %1644 = vmatpush1.msra.mxu0 0.0
  %1645 = vmatprep.subr.mxu0 0.0
  %1646 = vmatpush1.msra.mxu0 0.0
  %1647 = vmatprep.subr.mxu0 0.0
  %1648 = vmatpush1.msra.mxu0 0.0
  %1649 = vmatprep.subr.mxu0 0.0
  %1650 = vmatpush1.msra.mxu0 0.0
  %1651 = vmatprep.subr.mxu0 0.0
  %1652 = vmatpush1.msra.mxu0 0.0
  %1653 = vmatprep.subr.mxu0 0.0
  %1654 = vmatpush1.msra.mxu0 0.0
  %1655 = vmatprep.subr.mxu0 0.0
  %1656 = vmatpush1.msra.mxu0 0.0
  %1657 = vmatprep.subr.mxu0 0.0
  %1658 = vmatpush1.msra.mxu0 0.0
  %1659 = vmatprep.subr.mxu0 0.0
  %1660 = vmatpush1.msra.mxu0 0.0
  %1661 = vmatprep.subr.mxu0 0.0
  %1662 = vmatpush1.msra.mxu0 0.0
  %1663 = vmatprep.subr.mxu0 0.0
  %1664 = vmatpush1.msra.mxu0 0.0
  %1665 = vmatprep.mubr.f32.mxu0 0.0
  %1666 = vmatmul.mubr.f32.gmra.mrb[0].mxu0 %v1599
  %v1667 = vpop.f32.mrb[0].mxu0
  %v1668 = vadd.f32 %v1595, %v1667
  %v1669 = vpop.f32.mrb[0].mxu0
  %1670 = vdwg.mxu0
  %1671 = vrot.lane.b32.xlu0 %v147, 112
  %v1672 = vpop.permute.xlu0 %1671
  %1673 = vrot.lane.b32.xlu0 %v147, 80
  %v1674 = vpop.permute.xlu0 %1673
  %v1675 = vsel %vm249, %v1672, 0
  %v1677 = vsel %vm249, %v1674, 0
  %1679 = vmatprep.subr.mxu0 0.0
  %1680 = vmatpush1.xpose.msra.mxu0 %v1677
  %1681 = vmatprep.subr.mxu0 0.0
  %1682 = vmatpush1.xpose.msra.mxu0 0.0
  %1683 = vmatprep.subr.mxu0 0.0
  %1684 = vmatpush1.xpose.msra.mxu0 0.0
  %1685 = vmatprep.subr.mxu0 0.0
  %1686 = vmatpush1.xpose.msra.mxu0 0.0
  %1687 = vmatprep.subr.mxu0 0.0
  %1688 = vmatpush1.xpose.msra.mxu0 0.0
  %1689 = vmatprep.subr.mxu0 0.0
  %1690 = vmatpush1.xpose.msra.mxu0 0.0
  %1691 = vmatprep.subr.mxu0 0.0
  %1692 = vmatpush1.xpose.msra.mxu0 0.0
  %1693 = vmatprep.subr.mxu0 0.0
  %1694 = vmatpush1.xpose.msra.mxu0 0.0
  %1695 = vmatprep.subr.mxu0 0.0
  %1696 = vmatpush1.xpose.msra.mxu0 0.0
  %1697 = vmatprep.subr.mxu0 0.0
  %1698 = vmatpush1.xpose.msra.mxu0 0.0
  %1699 = vmatprep.subr.mxu0 0.0
  %1700 = vmatpush1.xpose.msra.mxu0 0.0
  %1701 = vmatprep.subr.mxu0 0.0
  %1702 = vmatpush1.xpose.msra.mxu0 0.0
  %1703 = vmatprep.subr.mxu0 0.0
  %1704 = vmatpush1.xpose.msra.mxu0 0.0
  %1705 = vmatprep.subr.mxu0 0.0
  %1706 = vmatpush1.xpose.msra.mxu0 0.0
  %1707 = vmatprep.subr.mxu0 0.0
  %1708 = vmatpush1.xpose.msra.mxu0 0.0
  %1709 = vmatprep.subr.mxu0 0.0
  %1710 = vmatpush1.xpose.msra.mxu0 0.0
  %1711 = vmatprep.subr.mxu0 0.0
  %1712 = vmatpush1.xpose.msra.mxu0 0.0
  %1713 = vmatprep.subr.mxu0 0.0
  %1714 = vmatpush1.xpose.msra.mxu0 0.0
  %1715 = vmatprep.subr.mxu0 0.0
  %1716 = vmatpush1.xpose.msra.mxu0 0.0
  %1717 = vmatprep.subr.mxu0 0.0
  %1718 = vmatpush1.xpose.msra.mxu0 0.0
  %1719 = vmatprep.subr.mxu0 0.0
  %1720 = vmatpush1.xpose.msra.mxu0 0.0
  %1721 = vmatprep.subr.mxu0 0.0
  %1722 = vmatpush1.xpose.msra.mxu0 0.0
  %1723 = vmatprep.subr.mxu0 0.0
  %1724 = vmatpush1.xpose.msra.mxu0 0.0
  %1725 = vmatprep.subr.mxu0 0.0
  %1726 = vmatpush1.xpose.msra.mxu0 0.0
  %1727 = vmatprep.subr.mxu0 0.0
  %1728 = vmatpush1.xpose.msra.mxu0 0.0
  %1729 = vmatprep.subr.mxu0 0.0
  %1730 = vmatpush1.xpose.msra.mxu0 0.0
  %1731 = vmatprep.subr.mxu0 0.0
  %1732 = vmatpush1.xpose.msra.mxu0 0.0
  %1733 = vmatprep.subr.mxu0 0.0
  %1734 = vmatpush1.xpose.msra.mxu0 0.0
  %1735 = vmatprep.subr.mxu0 0.0
  %1736 = vmatpush1.xpose.msra.mxu0 0.0
  %1737 = vmatprep.subr.mxu0 0.0
  %1738 = vmatpush1.xpose.msra.mxu0 0.0
  %1739 = vmatprep.subr.mxu0 0.0
  %1740 = vmatpush1.xpose.msra.mxu0 0.0
  %1741 = vmatprep.subr.mxu0 0.0
  %1742 = vmatpush1.xpose.msra.mxu0 0.0
  %1743 = vmatprep.mubr.f32.mxu0 0.0
  %1744 = vmatmul.mubr.f32.gmra.mrb[0].mxu0 %v1675
  %v1745 = vpop.f32.mrb[0].mxu0
  %v1746 = vadd.f32 0.0, %v1745
  %v1747 = vpop.f32.mrb[0].mxu0
  %1748 = vdwg.mxu0
  %v1749 = vsel %vm249, %v1746, -inf
  %1750 = vmax.xlane.f32.xlu0 %v1749
  %v1751 = vpop.xlane.xlu0 %1750
  %v1752 = vsub.f32 %v1746, %v1751
  %v1753 = vmul.f32 %v1752, 1.442695
  %v1754 = vpow.pop %v1753
  %v1755 = vsel %vm249, %v1754, 0.0
  %1756 = vadd.xlane.f32.xlu0 %v1755
  %v1757 = vpop.xlane.xlu0 %1756
  %v1758 = vrcp.pop %v1757
  %v1759 = vmul.f32 %v1754, %v1758
  %1760 = vrot.lane.b32.xlu0 %v239, 112
  %v1761 = vpop.permute.xlu0 %1760
  %v1764 = vsel %vm249, %v1759, 0
  %1766 = vmatprep.subr.mxu0 0.0
  %1767 = vmatpush1.msra.mxu0 %v1761
  %1768 = vmatprep.subr.mxu0 0.0
  %1769 = vmatpush1.msra.mxu0 0.0
  %1770 = vmatprep.subr.mxu0 0.0
  %1771 = vmatpush1.msra.mxu0 0.0
  %1772 = vmatprep.subr.mxu0 0.0
  %1773 = vmatpush1.msra.mxu0 0.0
  %1774 = vmatprep.subr.mxu0 0.0
  %1775 = vmatpush1.msra.mxu0 0.0
  %1776 = vmatprep.subr.mxu0 0.0
  %1777 = vmatpush1.msra.mxu0 0.0
  %1778 = vmatprep.subr.mxu0 0.0
  %1779 = vmatpush1.msra.mxu0 0.0
  %1780 = vmatprep.subr.mxu0 0.0
  %1781 = vmatpush1.msra.mxu0 0.0
  %1782 = vmatprep.subr.mxu0 0.0
  %1783 = vmatpush1.msra.mxu0 0.0
  %1784 = vmatprep.subr.mxu0 0.0
  %1785 = vmatpush1.msra.mxu0 0.0
  %1786 = vmatprep.subr.mxu0 0.0
  %1787 = vmatpush1.msra.mxu0 0.0
  %1788 = vmatprep.subr.mxu0 0.0
  %1789 = vmatpush1.msra.mxu0 0.0
  %1790 = vmatprep.subr.mxu0 0.0
  %1791 = vmatpush1.msra.mxu0 0.0
  %1792 = vmatprep.subr.mxu0 0.0
  %1793 = vmatpush1.msra.mxu0 0.0
  %1794 = vmatprep.subr.mxu0 0.0
  %1795 = vmatpush1.msra.mxu0 0.0
  %1796 = vmatprep.subr.mxu0 0.0
  %1797 = vmatpush1.msra.mxu0 0.0
  %1798 = vmatprep.subr.mxu0 0.0
  %1799 = vmatpush1.msra.mxu0 0.0
  %1800 = vmatprep.subr.mxu0 0.0
  %1801 = vmatpush1.msra.mxu0 0.0
  %1802 = vmatprep.subr.mxu0 0.0
  %1803 = vmatpush1.msra.mxu0 0.0
  %1804 = vmatprep.subr.mxu0 0.0
  %1805 = vmatpush1.msra.mxu0 0.0
  %1806 = vmatprep.subr.mxu0 0.0
  %1807 = vmatpush1.msra.mxu0 0.0
  %1808 = vmatprep.subr.mxu0 0.0
  %1809 = vmatpush1.msra.mxu0 0.0
  %1810 = vmatprep.subr.mxu0 0.0
  %1811 = vmatpush1.msra.mxu0 0.0
  %1812 = vmatprep.subr.mxu0 0.0
  %1813 = vmatpush1.msra.mxu0 0.0
  %1814 = vmatprep.subr.mxu0 0.0
  %1815 = vmatpush1.msra.mxu0 0.0
  %1816 = vmatprep.subr.mxu0 0.0
  %1817 = vmatpush1.msra.mxu0 0.0
  %1818 = vmatprep.subr.mxu0 0.0
  %1819 = vmatpush1.msra.mxu0 0.0
  %1820 = vmatprep.subr.mxu0 0.0
  %1821 = vmatpush1.msra.mxu0 0.0
  %1822 = vmatprep.subr.mxu0 0.0
  %1823 = vmatpush1.msra.mxu0 0.0
  %1824 = vmatprep.subr.mxu0 0.0
  %1825 = vmatpush1.msra.mxu0 0.0
  %1826 = vmatprep.subr.mxu0 0.0
  %1827 = vmatpush1.msra.mxu0 0.0
  %1828 = vmatprep.subr.mxu0 0.0
  %1829 = vmatpush1.msra.mxu0 0.0
  %1830 = vmatprep.mubr.f32.mxu0 0.0
  %1831 = vmatmul.mubr.f32.gmra.mrb[0].mxu0 %v1764
  %v1832 = vpop.f32.mrb[0].mxu0
  %v1833 = vadd.f32 0.0, %v1832
  %v1834 = vpop.f32.mrb[0].mxu0
  %1835 = vdwg.mxu0
  %v1837 = vsel %vm249, %v1833, 0
  %1839 = vmatprep.subr.mxu0 0.0
  %1840 = vmatpush1.msra.mxu0 %v244
  %1841 = vmatprep.subr.mxu0 0.0
  %1842 = vmatpush1.msra.mxu0 0.0
  %1843 = vmatprep.subr.mxu0 0.0
  %1844 = vmatpush1.msra.mxu0 0.0
  %1845 = vmatprep.subr.mxu0 0.0
  %1846 = vmatpush1.msra.mxu0 0.0
  %1847 = vmatprep.subr.mxu0 0.0
  %1848 = vmatpush1.msra.mxu0 0.0
  %1849 = vmatprep.subr.mxu0 0.0
  %1850 = vmatpush1.msra.mxu0 0.0
  %1851 = vmatprep.subr.mxu0 0.0
  %1852 = vmatpush1.msra.mxu0 0.0
  %1853 = vmatprep.subr.mxu0 0.0
  %1854 = vmatpush1.msra.mxu0 0.0
  %1855 = vmatprep.subr.mxu0 0.0
  %1856 = vmatpush1.msra.mxu0 0.0
  %1857 = vmatprep.subr.mxu0 0.0
  %1858 = vmatpush1.msra.mxu0 0.0
  %1859 = vmatprep.subr.mxu0 0.0
  %1860 = vmatpush1.msra.mxu0 0.0
  %1861 = vmatprep.subr.mxu0 0.0
  %1862 = vmatpush1.msra.mxu0 0.0
  %1863 = vmatprep.subr.mxu0 0.0
  %1864 = vmatpush1.msra.mxu0 0.0
  %1865 = vmatprep.subr.mxu0 0.0
  %1866 = vmatpush1.msra.mxu0 0.0
  %1867 = vmatprep.subr.mxu0 0.0
  %1868 = vmatpush1.msra.mxu0 0.0
  %1869 = vmatprep.subr.mxu0 0.0
  %1870 = vmatpush1.msra.mxu0 0.0
  %1871 = vmatprep.subr.mxu0 0.0
  %1872 = vmatpush1.msra.mxu0 0.0
  %1873 = vmatprep.subr.mxu0 0.0
  %1874 = vmatpush1.msra.mxu0 0.0
  %1875 = vmatprep.subr.mxu0 0.0
  %1876 = vmatpush1.msra.mxu0 0.0
  %1877 = vmatprep.subr.mxu0 0.0
  %1878 = vmatpush1.msra.mxu0 0.0
  %1879 = vmatprep.subr.mxu0 0.0
  %1880 = vmatpush1.msra.mxu0 0.0
  %1881 = vmatprep.subr.mxu0 0.0
  %1882 = vmatpush1.msra.mxu0 0.0
  %1883 = vmatprep.subr.mxu0 0.0
  %1884 = vmatpush1.msra.mxu0 0.0
  %1885 = vmatprep.subr.mxu0 0.0
  %1886 = vmatpush1.msra.mxu0 0.0
  %1887 = vmatprep.subr.mxu0 0.0
  %1888 = vmatpush1.msra.mxu0 0.0
  %1889 = vmatprep.subr.mxu0 0.0
  %1890 = vmatpush1.msra.mxu0 0.0
  %1891 = vmatprep.subr.mxu0 0.0
  %1892 = vmatpush1.msra.mxu0 0.0
  %1893 = vmatprep.subr.mxu0 0.0
  %1894 = vmatpush1.msra.mxu0 0.0
  %1895 = vmatprep.subr.mxu0 0.0
  %1896 = vmatpush1.msra.mxu0 0.0
  %1897 = vmatprep.subr.mxu0 0.0
  %1898 = vmatpush1.msra.mxu0 0.0
  %1899 = vmatprep.subr.mxu0 0.0
  %1900 = vmatpush1.msra.mxu0 0.0
  %1901 = vmatprep.subr.mxu0 0.0
  %1902 = vmatpush1.msra.mxu0 0.0
  %1903 = vmatprep.mubr.f32.mxu0 0.0
  %1904 = vmatmul.mubr.f32.gmra.mrb[0].mxu0 %v1837
  %v1905 = vpop.f32.mrb[0].mxu0
  %v1906 = vadd.f32 0.0, %v1905
  %v1907 = vpop.f32.mrb[0].mxu0
  %1908 = vdwg.mxu0
  %v1909 = vadd.f32 %v1668, %v1906
  %1910 = vrot.lane.b32.xlu0 %v147, 104
  %v1911 = vpop.permute.xlu0 %1910
  %1912 = vrot.lane.b32.xlu0 %v147, 72
  %v1913 = vpop.permute.xlu0 %1912
  %v1914 = vsel %vm249, %v1911, 0
  %v1916 = vsel %vm249, %v1913, 0
  %1918 = vmatprep.subr.mxu0 0.0
  %1919 = vmatpush1.xpose.msra.mxu0 %v1916
  %1920 = vmatprep.subr.mxu0 0.0
  %1921 = vmatpush1.xpose.msra.mxu0 0.0
  %1922 = vmatprep.subr.mxu0 0.0
  %1923 = vmatpush1.xpose.msra.mxu0 0.0
  %1924 = vmatprep.subr.mxu0 0.0
  %1925 = vmatpush1.xpose.msra.mxu0 0.0
  %1926 = vmatprep.subr.mxu0 0.0
  %1927 = vmatpush1.xpose.msra.mxu0 0.0
  %1928 = vmatprep.subr.mxu0 0.0
  %1929 = vmatpush1.xpose.msra.mxu0 0.0
  %1930 = vmatprep.subr.mxu0 0.0
  %1931 = vmatpush1.xpose.msra.mxu0 0.0
  %1932 = vmatprep.subr.mxu0 0.0
  %1933 = vmatpush1.xpose.msra.mxu0 0.0
  %1934 = vmatprep.subr.mxu0 0.0
  %1935 = vmatpush1.xpose.msra.mxu0 0.0
  %1936 = vmatprep.subr.mxu0 0.0
  %1937 = vmatpush1.xpose.msra.mxu0 0.0
  %1938 = vmatprep.subr.mxu0 0.0
  %1939 = vmatpush1.xpose.msra.mxu0 0.0
  %1940 = vmatprep.subr.mxu0 0.0
  %1941 = vmatpush1.xpose.msra.mxu0 0.0
  %1942 = vmatprep.subr.mxu0 0.0
  %1943 = vmatpush1.xpose.msra.mxu0 0.0
  %1944 = vmatprep.subr.mxu0 0.0
  %1945 = vmatpush1.xpose.msra.mxu0 0.0
  %1946 = vmatprep.subr.mxu0 0.0
  %1947 = vmatpush1.xpose.msra.mxu0 0.0
  %1948 = vmatprep.subr.mxu0 0.0
  %1949 = vmatpush1.xpose.msra.mxu0 0.0
  %1950 = vmatprep.subr.mxu0 0.0
  %1951 = vmatpush1.xpose.msra.mxu0 0.0
  %1952 = vmatprep.subr.mxu0 0.0
  %1953 = vmatpush1.xpose.msra.mxu0 0.0
  %1954 = vmatprep.subr.mxu0 0.0
  %1955 = vmatpush1.xpose.msra.mxu0 0.0
  %1956 = vmatprep.subr.mxu0 0.0
  %1957 = vmatpush1.xpose.msra.mxu0 0.0
  %1958 = vmatprep.subr.mxu0 0.0
  %1959 = vmatpush1.xpose.msra.mxu0 0.0
  %1960 = vmatprep.subr.mxu0 0.0
  %1961 = vmatpush1.xpose.msra.mxu0 0.0
  %1962 = vmatprep.subr.mxu0 0.0
  %1963 = vmatpush1.xpose.msra.mxu0 0.0
  %1964 = vmatprep.subr.mxu0 0.0
  %1965 = vmatpush1.xpose.msra.mxu0 0.0
  %1966 = vmatprep.subr.mxu0 0.0
  %1967 = vmatpush1.xpose.msra.mxu0 0.0
  %1968 = vmatprep.subr.mxu0 0.0
  %1969 = vmatpush1.xpose.msra.mxu0 0.0
  %1970 = vmatprep.subr.mxu0 0.0
  %1971 = vmatpush1.xpose.msra.mxu0 0.0
  %1972 = vmatprep.subr.mxu0 0.0
  %1973 = vmatpush1.xpose.msra.mxu0 0.0
  %1974 = vmatprep.subr.mxu0 0.0
  %1975 = vmatpush1.xpose.msra.mxu0 0.0
  %1976 = vmatprep.subr.mxu0 0.0
  %1977 = vmatpush1.xpose.msra.mxu0 0.0
  %1978 = vmatprep.subr.mxu0 0.0
  %1979 = vmatpush1.xpose.msra.mxu0 0.0
  %1980 = vmatprep.subr.mxu0 0.0
  %1981 = vmatpush1.xpose.msra.mxu0 0.0
  %1982 = vmatprep.mubr.f32.mxu0 0.0
  %1983 = vmatmul.mubr.f32.gmra.mrb[0].mxu0 %v1914
  %v1984 = vpop.f32.mrb[0].mxu0
  %v1985 = vadd.f32 0.0, %v1984
  %v1986 = vpop.f32.mrb[0].mxu0
  %1987 = vdwg.mxu0
  %v1988 = vsel %vm249, %v1985, -inf
  %1989 = vmax.xlane.f32.xlu0 %v1988
  %v1990 = vpop.xlane.xlu0 %1989
  %v1991 = vsub.f32 %v1985, %v1990
  %v1992 = vmul.f32 %v1991, 1.442695
  %v1993 = vpow.pop %v1992
  %v1994 = vsel %vm249, %v1993, 0.0
  %1995 = vadd.xlane.f32.xlu0 %v1994
  %v1996 = vpop.xlane.xlu0 %1995
  %v1997 = vrcp.pop %v1996
  %v1998 = vmul.f32 %v1993, %v1997
  %1999 = vrot.lane.b32.xlu0 %v239, 104
  %v2000 = vpop.permute.xlu0 %1999
  %v2003 = vsel %vm249, %v1998, 0
  %2005 = vmatprep.subr.mxu0 0.0
  %2006 = vmatpush1.msra.mxu0 %v2000
  %2007 = vmatprep.subr.mxu0 0.0
  %2008 = vmatpush1.msra.mxu0 0.0
  %2009 = vmatprep.subr.mxu0 0.0
  %2010 = vmatpush1.msra.mxu0 0.0
  %2011 = vmatprep.subr.mxu0 0.0
  %2012 = vmatpush1.msra.mxu0 0.0
  %2013 = vmatprep.subr.mxu0 0.0
  %2014 = vmatpush1.msra.mxu0 0.0
  %2015 = vmatprep.subr.mxu0 0.0
  %2016 = vmatpush1.msra.mxu0 0.0
  %2017 = vmatprep.subr.mxu0 0.0
  %2018 = vmatpush1.msra.mxu0 0.0
  %2019 = vmatprep.subr.mxu0 0.0
  %2020 = vmatpush1.msra.mxu0 0.0
  %2021 = vmatprep.subr.mxu0 0.0
  %2022 = vmatpush1.msra.mxu0 0.0
  %2023 = vmatprep.subr.mxu0 0.0
  %2024 = vmatpush1.msra.mxu0 0.0
  %2025 = vmatprep.subr.mxu0 0.0
  %2026 = vmatpush1.msra.mxu0 0.0
  %2027 = vmatprep.subr.mxu0 0.0
  %2028 = vmatpush1.msra.mxu0 0.0
  %2029 = vmatprep.subr.mxu0 0.0
  %2030 = vmatpush1.msra.mxu0 0.0
  %2031 = vmatprep.subr.mxu0 0.0
  %2032 = vmatpush1.msra.mxu0 0.0
  %2033 = vmatprep.subr.mxu0 0.0
  %2034 = vmatpush1.msra.mxu0 0.0
  %2035 = vmatprep.subr.mxu0 0.0
  %2036 = vmatpush1.msra.mxu0 0.0
  %2037 = vmatprep.subr.mxu0 0.0
  %2038 = vmatpush1.msra.mxu0 0.0
  %2039 = vmatprep.subr.mxu0 0.0
  %2040 = vmatpush1.msra.mxu0 0.0
  %2041 = vmatprep.subr.mxu0 0.0
  %2042 = vmatpush1.msra.mxu0 0.0
  %2043 = vmatprep.subr.mxu0 0.0
  %2044 = vmatpush1.msra.mxu0 0.0
  %2045 = vmatprep.subr.mxu0 0.0
  %2046 = vmatpush1.msra.mxu0 0.0
  %2047 = vmatprep.subr.mxu0 0.0
  %2048 = vmatpush1.msra.mxu0 0.0
  %2049 = vmatprep.subr.mxu0 0.0
  %2050 = vmatpush1.msra.mxu0 0.0
  %2051 = vmatprep.subr.mxu0 0.0
  %2052 = vmatpush1.msra.mxu0 0.0
  %2053 = vmatprep.subr.mxu0 0.0
  %2054 = vmatpush1.msra.mxu0 0.0
  %2055 = vmatprep.subr.mxu0 0.0
  %2056 = vmatpush1.msra.mxu0 0.0
  %2057 = vmatprep.subr.mxu0 0.0
  %2058 = vmatpush1.msra.mxu0 0.0
  %2059 = vmatprep.subr.mxu0 0.0
  %2060 = vmatpush1.msra.mxu0 0.0
  %2061 = vmatprep.subr.mxu0 0.0
  %2062 = vmatpush1.msra.mxu0 0.0
  %2063 = vmatprep.subr.mxu0 0.0
  %2064 = vmatpush1.msra.mxu0 0.0
  %2065 = vmatprep.subr.mxu0 0.0
  %2066 = vmatpush1.msra.mxu0 0.0
  %2067 = vmatprep.subr.mxu0 0.0
  %2068 = vmatpush1.msra.mxu0 0.0
  %2069 = vmatprep.mubr.f32.mxu0 0.0
  %2070 = vmatmul.mubr.f32.gmra.mrb[0].mxu0 %v2003
  %v2071 = vpop.f32.mrb[0].mxu0
  %v2072 = vadd.f32 0.0, %v2071
  %v2073 = vpop.f32.mrb[0].mxu0
  %2074 = vdwg.mxu0
  %v2076 = vsel %vm249, %v2072, 0
  %2078 = vmatprep.subr.mxu0 0.0
  %2079 = vmatpush1.msra.mxu0 %v245
  %2080 = vmatprep.subr.mxu0 0.0
  %2081 = vmatpush1.msra.mxu0 0.0
  %2082 = vmatprep.subr.mxu0 0.0
  %2083 = vmatpush1.msra.mxu0 0.0
  %2084 = vmatprep.subr.mxu0 0.0
  %2085 = vmatpush1.msra.mxu0 0.0
  %2086 = vmatprep.subr.mxu0 0.0
  %2087 = vmatpush1.msra.mxu0 0.0
  %2088 = vmatprep.subr.mxu0 0.0
  %2089 = vmatpush1.msra.mxu0 0.0
  %2090 = vmatprep.subr.mxu0 0.0
  %2091 = vmatpush1.msra.mxu0 0.0
  %2092 = vmatprep.subr.mxu0 0.0
  %2093 = vmatpush1.msra.mxu0 0.0
  %2094 = vmatprep.subr.mxu0 0.0
  %2095 = vmatpush1.msra.mxu0 0.0
  %2096 = vmatprep.subr.mxu0 0.0
  %2097 = vmatpush1.msra.mxu0 0.0
  %2098 = vmatprep.subr.mxu0 0.0
  %2099 = vmatpush1.msra.mxu0 0.0
  %2100 = vmatprep.subr.mxu0 0.0
  %2101 = vmatpush1.msra.mxu0 0.0
  %2102 = vmatprep.subr.mxu0 0.0
  %2103 = vmatpush1.msra.mxu0 0.0
  %2104 = vmatprep.subr.mxu0 0.0
  %2105 = vmatpush1.msra.mxu0 0.0
  %2106 = vmatprep.subr.mxu0 0.0
  %2107 = vmatpush1.msra.mxu0 0.0
  %2108 = vmatprep.subr.mxu0 0.0
  %2109 = vmatpush1.msra.mxu0 0.0
  %2110 = vmatprep.subr.mxu0 0.0
  %2111 = vmatpush1.msra.mxu0 0.0
  %2112 = vmatprep.subr.mxu0 0.0
  %2113 = vmatpush1.msra.mxu0 0.0
  %2114 = vmatprep.subr.mxu0 0.0
  %2115 = vmatpush1.msra.mxu0 0.0
  %2116 = vmatprep.subr.mxu0 0.0
  %2117 = vmatpush1.msra.mxu0 0.0
  %2118 = vmatprep.subr.mxu0 0.0
  %2119 = vmatpush1.msra.mxu0 0.0
  %2120 = vmatprep.subr.mxu0 0.0
  %2121 = vmatpush1.msra.mxu0 0.0
  %2122 = vmatprep.subr.mxu0 0.0
  %2123 = vmatpush1.msra.mxu0 0.0
  %2124 = vmatprep.subr.mxu0 0.0
  %2125 = vmatpush1.msra.mxu0 0.0
  %2126 = vmatprep.subr.mxu0 0.0
  %2127 = vmatpush1.msra.mxu0 0.0
  %2128 = vmatprep.subr.mxu0 0.0
  %2129 = vmatpush1.msra.mxu0 0.0
  %2130 = vmatprep.subr.mxu0 0.0
  %2131 = vmatpush1.msra.mxu0 0.0
  %2132 = vmatprep.subr.mxu0 0.0
  %2133 = vmatpush1.msra.mxu0 0.0
  %2134 = vmatprep.subr.mxu0 0.0
  %2135 = vmatpush1.msra.mxu0 0.0
  %2136 = vmatprep.subr.mxu0 0.0
  %2137 = vmatpush1.msra.mxu0 0.0
  %2138 = vmatprep.subr.mxu0 0.0
  %2139 = vmatpush1.msra.mxu0 0.0
  %2140 = vmatprep.subr.mxu0 0.0
  %2141 = vmatpush1.msra.mxu0 0.0
  %2142 = vmatprep.mubr.f32.mxu0 0.0
  %2143 = vmatmul.mubr.f32.gmra.mrb[0].mxu0 %v2076
  %v2144 = vpop.f32.mrb[0].mxu0
  %v2145 = vadd.f32 0.0, %v2144
  %v2146 = vpop.f32.mrb[0].mxu0
  %2147 = vdwg.mxu0
  %v2148 = vadd.f32 %v1909, %v2145
  %v2149 = vld [vmem:[%s7] sm:$0x1]
  %v2151 = vlaneseq
  %v2152 = vshrl.u32 %v2151, 7
  %v2153 = vsub.s32 0, %v2152
  %v2154 = vrot.slane %v2149, %v2153
  %v2156 = vadd.f32 %v1197, %v2154
  %v2157 = vadd.f32 %v2148, %v2154
  %v2158 = vadd.f32 %v55, %v2156
  %v2159 = vadd.f32 %v56, %v2157
  %v2160 = vsel %vm68, %v2158, 0.0
  %2161 = vadd.xlane.f32.xlu0 %v2160
  %v2162 = vpop.xlane.xlu0 %2161
  %v2163 = vsel %vm68, %v2159, 0.0
  %2164 = vadd.xlane.f32.xlu0 %v2163
  %v2165 = vpop.xlane.xlu0 %2164
  %v2166 = vrcp.pop 32.0
  %v2167 = vmul.f32 %v2162, %v2166
  %v2168 = vmul.f32 %v2165, %v2166
  %v2169 = vsub.f32 %v2158, %v2167
  %v2170 = vsub.f32 %v2159, %v2168
  %v2171 = vmul.f32 %v2169, %v2169
  %v2172 = vmul.f32 %v2170, %v2170
  %v2173 = vsel %vm68, %v2171, 0.0
  %2174 = vadd.xlane.f32.xlu0 %v2173
  %v2175 = vpop.xlane.xlu0 %2174
  %v2176 = vsel %vm68, %v2172, 0.0
  %2177 = vadd.xlane.f32.xlu0 %v2176
  %v2178 = vpop.xlane.xlu0 %2177
  %v2179 = vmul.f32 %v2175, %v2166
  %v2180 = vmul.f32 %v2178, %v2166
  %v2181 = vadd.f32 %v2179, 1e-05
  %v2182 = vadd.f32 %v2180, 1e-05
  %v2183 = vrsqrt.pop %v2181
  %v2184 = vrsqrt.pop %v2182
  %v2185 = vmul.f32 %v2169, %v2183
  %v2186 = vmul.f32 %v2170, %v2184
  %v2187 = vld [vmem:[%s8] sm:$0x1]
  %v2189 = vlaneseq
  %v2190 = vshrl.u32 %v2189, 7
  %v2191 = vsub.s32 0, %v2190
  %v2192 = vrot.slane %v2187, %v2191
  %v2194 = vmul.f32 %v2185, %v2192
  %v2195 = vmul.f32 %v2186, %v2192
  %v2196 = vld [vmem:[%s9] sm:$0x1]
  %v2198 = vlaneseq
  %v2199 = vshrl.u32 %v2198, 7
  %v2200 = vsub.s32 0, %v2199
  %v2201 = vrot.slane %v2196, %v2200
  %v2203 = vadd.f32 %v2194, %v2201
  %v2204 = vadd.f32 %v2195, %v2201
  %v2205 = vld [vmem:[%s10] sm:$0xff]
  %v2206 = vld [vmem:[%s10 + $0x8] sm:$0xff]
  %v2207 = vld [vmem:[%s10 + $0x10] sm:$0xff]
  %v2208 = vld [vmem:[%s10 + $0x18] sm:$0xff]
  %v2209 = vld [vmem:[%s11] sm:$0x1]
  %v2211 = vlaneseq
  %v2212 = vshrl.u32 %v2211, 7
  %v2213 = vsub.s32 0, %v2212
  %v2214 = vrot.slane %v2209, %v2213
  %v2217 = vsel %vm68, %v2203, 0
  %v2220 = vsel %vm68, %v2204, 0
  %2222 = vmatprep.subr.mxu0 0.0
  %2223 = vmatpush1.msra.mxu0 %v2205
  %2224 = vmatprep.subr.mxu0 0.0
  %2225 = vmatpush1.msra.mxu0 %v2206
  %2226 = vmatprep.subr.mxu0 0.0
  %2227 = vmatpush1.msra.mxu0 %v2207
  %2228 = vmatprep.subr.mxu0 0.0
  %2229 = vmatpush1.msra.mxu0 %v2208
  %2230 = vmatprep.subr.mxu0 0.0
  %2231 = vmatpush1.msra.mxu0 0.0
  %2232 = vmatprep.subr.mxu0 0.0
  %2233 = vmatpush1.msra.mxu0 0.0
  %2234 = vmatprep.subr.mxu0 0.0
  %2235 = vmatpush1.msra.mxu0 0.0
  %2236 = vmatprep.subr.mxu0 0.0
  %2237 = vmatpush1.msra.mxu0 0.0
  %2238 = vmatprep.subr.mxu0 0.0
  %2239 = vmatpush1.msra.mxu0 0.0
  %2240 = vmatprep.subr.mxu0 0.0
  %2241 = vmatpush1.msra.mxu0 0.0
  %2242 = vmatprep.subr.mxu0 0.0
  %2243 = vmatpush1.msra.mxu0 0.0
  %2244 = vmatprep.subr.mxu0 0.0
  %2245 = vmatpush1.msra.mxu0 0.0
  %2246 = vmatprep.subr.mxu0 0.0
  %2247 = vmatpush1.msra.mxu0 0.0
  %2248 = vmatprep.subr.mxu0 0.0
  %2249 = vmatpush1.msra.mxu0 0.0
  %2250 = vmatprep.subr.mxu0 0.0
  %2251 = vmatpush1.msra.mxu0 0.0
  %2252 = vmatprep.subr.mxu0 0.0
  %2253 = vmatpush1.msra.mxu0 0.0
  %2254 = vmatprep.subr.mxu0 0.0
  %2255 = vmatpush1.msra.mxu0 0.0
  %2256 = vmatprep.subr.mxu0 0.0
  %2257 = vmatpush1.msra.mxu0 0.0
  %2258 = vmatprep.subr.mxu0 0.0
  %2259 = vmatpush1.msra.mxu0 0.0
  %2260 = vmatprep.subr.mxu0 0.0
  %2261 = vmatpush1.msra.mxu0 0.0
  %2262 = vmatprep.subr.mxu0 0.0
  %2263 = vmatpush1.msra.mxu0 0.0
  %2264 = vmatprep.subr.mxu0 0.0
  %2265 = vmatpush1.msra.mxu0 0.0
  %2266 = vmatprep.subr.mxu0 0.0
  %2267 = vmatpush1.msra.mxu0 0.0
  %2268 = vmatprep.subr.mxu0 0.0
  %2269 = vmatpush1.msra.mxu0 0.0
  %2270 = vmatprep.subr.mxu0 0.0
  %2271 = vmatpush1.msra.mxu0 0.0
  %2272 = vmatprep.subr.mxu0 0.0
  %2273 = vmatpush1.msra.mxu0 0.0
  %2274 = vmatprep.subr.mxu0 0.0
  %2275 = vmatpush1.msra.mxu0 0.0
  %2276 = vmatprep.subr.mxu0 0.0
  %2277 = vmatpush1.msra.mxu0 0.0
  %2278 = vmatprep.subr.mxu0 0.0
  %2279 = vmatpush1.msra.mxu0 0.0
  %2280 = vmatprep.subr.mxu0 0.0
  %2281 = vmatpush1.msra.mxu0 0.0
  %2282 = vmatprep.subr.mxu0 0.0
  %2283 = vmatpush1.msra.mxu0 0.0
  %2284 = vmatprep.subr.mxu0 0.0
  %2285 = vmatpush1.msra.mxu0 0.0
  %2286 = vmatprep.mubr.f32.mxu0 0.0
  %2287 = vmatmul.mubr.f32.gmra.mrb[0].mxu0 %v2217
  %v2288 = vpop.f32.mrb[0].mxu0
  %v2289 = vadd.f32 %v2214, %v2288
  %v2290 = vpop.f32.mrb[0].mxu0
  %2291 = vmatprep.mubr.f32.mxu0 0.0
  %2292 = vmatmul.mubr.f32.gmra.mrb[0].mxu0 %v2220
  %v2293 = vpop.f32.mrb[0].mxu0
  %v2294 = vadd.f32 %v2214, %v2293
  %v2295 = vpop.f32.mrb[0].mxu0
  %2296 = vdwg.mxu0
  %v2297 = vmax.f32 %v2289, 0.0
  %v2298 = vmax.f32 %v2294, 0.0
  %v2299 = vld [vmem:[%s12] sm:$0xff]
  %v2300 = vld [vmem:[%s12 + $0x8] sm:$0xff]
  %v2301 = vld [vmem:[%s12 + $0x10] sm:$0xff]
  %v2302 = vld [vmem:[%s12 + $0x18] sm:$0xff]
  %v2303 = vld [vmem:[%s12 + $0x20] sm:$0xff]
  %v2304 = vld [vmem:[%s12 + $0x28] sm:$0xff]
  %v2305 = vld [vmem:[%s12 + $0x30] sm:$0xff]
  %v2306 = vld [vmem:[%s12 + $0x38] sm:$0xff]
  %vm2307 = vcmask 523264
  %v2309 = vsel %vm2307, %v2297, 0
  %v2312 = vsel %vm2307, %v2298, 0
  %2314 = vmatprep.subr.mxu0 0.0
  %2315 = vmatpush1.msra.mxu0 %v2299
  %2316 = vmatprep.subr.mxu0 0.0
  %2317 = vmatpush1.msra.mxu0 %v2300
  %2318 = vmatprep.subr.mxu0 0.0
  %2319 = vmatpush1.msra.mxu0 %v2301
  %2320 = vmatprep.subr.mxu0 0.0
  %2321 = vmatpush1.msra.mxu0 %v2302
  %2322 = vmatprep.subr.mxu0 0.0
  %2323 = vmatpush1.msra.mxu0 %v2303
  %2324 = vmatprep.subr.mxu0 0.0
  %2325 = vmatpush1.msra.mxu0 %v2304
  %2326 = vmatprep.subr.mxu0 0.0
  %2327 = vmatpush1.msra.mxu0 %v2305
  %2328 = vmatprep.subr.mxu0 0.0
  %2329 = vmatpush1.msra.mxu0 %v2306
  %2330 = vmatprep.subr.mxu0 0.0
  %2331 = vmatpush1.msra.mxu0 0.0
  %2332 = vmatprep.subr.mxu0 0.0
  %2333 = vmatpush1.msra.mxu0 0.0
  %2334 = vmatprep.subr.mxu0 0.0
  %2335 = vmatpush1.msra.mxu0 0.0
  %2336 = vmatprep.subr.mxu0 0.0
  %2337 = vmatpush1.msra.mxu0 0.0
  %2338 = vmatprep.subr.mxu0 0.0
  %2339 = vmatpush1.msra.mxu0 0.0
  %2340 = vmatprep.subr.mxu0 0.0
  %2341 = vmatpush1.msra.mxu0 0.0
  %2342 = vmatprep.subr.mxu0 0.0
  %2343 = vmatpush1.msra.mxu0 0.0
  %2344 = vmatprep.subr.mxu0 0.0
  %2345 = vmatpush1.msra.mxu0 0.0
  %2346 = vmatprep.subr.mxu0 0.0
  %2347 = vmatpush1.msra.mxu0 0.0
  %2348 = vmatprep.subr.mxu0 0.0
  %2349 = vmatpush1.msra.mxu0 0.0
  %2350 = vmatprep.subr.mxu0 0.0
  %2351 = vmatpush1.msra.mxu0 0.0
  %2352 = vmatprep.subr.mxu0 0.0
  %2353 = vmatpush1.msra.mxu0 0.0
  %2354 = vmatprep.subr.mxu0 0.0
  %2355 = vmatpush1.msra.mxu0 0.0
  %2356 = vmatprep.subr.mxu0 0.0
  %2357 = vmatpush1.msra.mxu0 0.0
  %2358 = vmatprep.subr.mxu0 0.0
  %2359 = vmatpush1.msra.mxu0 0.0
  %2360 = vmatprep.subr.mxu0 0.0
  %2361 = vmatpush1.msra.mxu0 0.0
  %2362 = vmatprep.subr.mxu0 0.0
  %2363 = vmatpush1.msra.mxu0 0.0
  %2364 = vmatprep.subr.mxu0 0.0
  %2365 = vmatpush1.msra.mxu0 0.0
  %2366 = vmatprep.subr.mxu0 0.0
  %2367 = vmatpush1.msra.mxu0 0.0
  %2368 = vmatprep.subr.mxu0 0.0
  %2369 = vmatpush1.msra.mxu0 0.0
  %2370 = vmatprep.subr.mxu0 0.0
  %2371 = vmatpush1.msra.mxu0 0.0
  %2372 = vmatprep.subr.mxu0 0.0
  %2373 = vmatpush1.msra.mxu0 0.0
  %2374 = vmatprep.subr.mxu0 0.0
  %2375 = vmatpush1.msra.mxu0 0.0
  %2376 = vmatprep.subr.mxu0 0.0
  %2377 = vmatpush1.msra.mxu0 0.0
  %2378 = vmatprep.mubr.f32.mxu0 0.0
  %2379 = vmatmul.mubr.f32.gmra.mrb[0].mxu0 %v2309
  %v2380 = vpop.f32.mrb[0].mxu0
  %v2381 = vadd.f32 0.0, %v2380
  %v2382 = vpop.f32.mrb[0].mxu0
  %2383 = vmatprep.mubr.f32.mxu0 0.0
  %2384 = vmatmul.mubr.f32.gmra.mrb[0].mxu0 %v2312
  %v2385 = vpop.f32.mrb[0].mxu0
  %v2386 = vadd.f32 0.0, %v2385
  %v2387 = vpop.f32.mrb[0].mxu0
  %2388 = vdwg.mxu0
  %v2389 = vadd.f32 %v2203, %v2381
  %v2390 = vadd.f32 %v2204, %v2386
  %v2391 = vld [vmem:[%s13] sm:$0x1]
  %v2393 = vlaneseq
  %v2394 = vshrl.u32 %v2393, 7
  %v2395 = vsub.s32 0, %v2394
  %v2396 = vrot.slane %v2391, %v2395
  %v2398 = vadd.f32 %v2389, %v2396
  %v2399 = vadd.f32 %v2390, %v2396
  %v2400 = vsel %vm68, %v2398, 0.0
  %2401 = vadd.xlane.f32.xlu0 %v2400
  %v2402 = vpop.xlane.xlu0 %2401
  %v2403 = vsel %vm68, %v2399, 0.0
  %2404 = vadd.xlane.f32.xlu0 %v2403
  %v2405 = vpop.xlane.xlu0 %2404
  %v2406 = vmul.f32 %v2402, %v2166
  %v2407 = vmul.f32 %v2405, %v2166
  %v2408 = vsub.f32 %v2398, %v2406
  %v2409 = vsub.f32 %v2399, %v2407
  %v2410 = vmul.f32 %v2408, %v2408
  %v2411 = vmul.f32 %v2409, %v2409
  %v2412 = vsel %vm68, %v2410, 0.0
  %2413 = vadd.xlane.f32.xlu0 %v2412
  %v2414 = vpop.xlane.xlu0 %2413
  %v2415 = vsel %vm68, %v2411, 0.0
  %2416 = vadd.xlane.f32.xlu0 %v2415
  %v2417 = vpop.xlane.xlu0 %2416
  %v2418 = vmul.f32 %v2414, %v2166
  %v2419 = vmul.f32 %v2417, %v2166
  %v2420 = vadd.f32 %v2418, 1e-05
  %v2421 = vadd.f32 %v2419, 1e-05
  %v2422 = vrsqrt.pop %v2420
  %v2423 = vrsqrt.pop %v2421
  %v2424 = vmul.f32 %v2408, %v2422
  %v2425 = vmul.f32 %v2409, %v2423
  %v2426 = vld [vmem:[%s14] sm:$0x1]
  %v2428 = vlaneseq
  %v2429 = vshrl.u32 %v2428, 7
  %v2430 = vsub.s32 0, %v2429
  %v2431 = vrot.slane %v2426, %v2430
  %v2433 = vmul.f32 %v2424, %v2431
  %v2434 = vmul.f32 %v2425, %v2431
  %v2435 = vld [vmem:[%s15] sm:$0x1]
  %v2437 = vlaneseq
  %v2438 = vshrl.u32 %v2437, 7
  %v2439 = vsub.s32 0, %v2438
  %v2440 = vrot.slane %v2435, %v2439
  %v2442 = vadd.f32 %v2433, %v2440
  %v2443 = vadd.f32 %v2434, %v2440
  %2444 = vst.msk [vmem:[%s16] sm:$0xff] %vm68, %v2442
  %2445 = vst.msk [vmem:[%s16 + $0x8] sm:$0xff] %vm68, %v2443
  // Predicated region
  $region66: #{transformer_encoder_layer.1} parent=0 // pred_check
    _
  $region67: #{transformer_encoder_layer.1} parent=0 // pred_check_branch
    %2447 = sbr.rel (0) target = $region69
  $region68: #{transformer_encoder_layer.1} parent=0 // pred_region
    _
  $region69: #{transformer_encoder_layer.1} parent=0 // pred_fallthru
    _
  // Predicated region
  $region70: #{transformer_encoder_layer.1} parent=0 // pred_check
    _
  $region71: #{transformer_encoder_layer.1} parent=0 // pred_check_branch
    %2449 = sbr.rel (0) target = $region73
  $region72: #{transformer_encoder_layer.1} parent=0 // pred_region
    _
  $region73: #{transformer_encoder_layer.1} parent=0 // pred_fallthru
    _

</llo_original>
